<compile_context>
chip_gen: v7x
topology: tpu7x:2x2x1
jax: 0.10.0
libtpu: 0.0.40
codegen_flags: <defaults>
</compile_context>

<pallas_src>
import functools

import jax
import jax.numpy as jnp
from jax.experimental import pallas as pl
from jax.experimental.pallas import tpu as pltpu


def _round_up(x, m):
    return (x + m - 1) // m * m


def _pick_tile(extent, candidates):
    for c in candidates:
        if extent % c == 0:
            return c
    return extent


# --------------------------------------------------------------------------
# Kernel 1: WX[r] = X @ W[r]   (bf16 MXU matmul, f32 accumulate, bf16 store)
# Grid: (N/tn, R, Fin/tk) with the fin reduction innermost.
# --------------------------------------------------------------------------
def _wx_kernel(x_ref, w_ref, wx_ref, acc_ref):
    # x_ref:  (tn, tk)        bf16
    # w_ref:  (1, tk, Fo_p)   bf16
    # wx_ref: (1, tn, Fo_p)   bf16
    # acc_ref:(tn, Fo_p)      f32 VMEM accumulator (resident across k)
    k = pl.program_id(2)

    @pl.when(k == 0)
    def _():
        acc_ref[...] = jnp.zeros_like(acc_ref)

    acc_ref[...] += jnp.dot(
        x_ref[...], w_ref[0], preferred_element_type=jnp.float32
    )

    @pl.when(k == pl.num_programs(2) - 1)
    def _():
        wx_ref[0] = acc_ref[...].astype(wx_ref.dtype)


# --------------------------------------------------------------------------
# Kernel 2: Y[m-tile] = sum_r sum_n  A[r, m-tile, n-tile] @ WX[r, n-tile]
# A is streamed as int8 (0/1) and cast to bf16 on the VPU (free filler in a
# mem-bound kernel).  WX is either fully VMEM-resident (sliced with pl.ds) or
# streamed per (r, n) block.  Optional fused ReLU + narrow cast in the epilogue.
# --------------------------------------------------------------------------
def _agg_kernel(a_ref, wx_ref, y_ref, acc_ref, *, apply_relu, wx_resident, tn):
    # a_ref:  (1, tm, tn)           int8
    # wx_ref: (R, Np, Fo_p) bf16    if wx_resident else (1, tn, Fo_p) bf16
    # y_ref:  (tm, Fo_p)            out dtype
    # acc_ref:(tm, Fo_p)            f32 VMEM accumulator (resident across (r, n))
    r = pl.program_id(1)
    n = pl.program_id(2)

    @pl.when(jnp.logical_and(r == 0, n == 0))
    def _():
        acc_ref[...] = jnp.zeros_like(acc_ref)

    a = a_ref[0].astype(jnp.bfloat16)
    if wx_resident:
        col0 = pl.multiple_of(n * tn, tn)
        wx = wx_ref[r, pl.ds(col0, tn), :]
    else:
        wx = wx_ref[0]

    acc_ref[...] += jnp.dot(a, wx, preferred_element_type=jnp.float32)

    @pl.when(jnp.logical_and(r == pl.num_programs(1) - 1,
                             n == pl.num_programs(2) - 1))
    def _():
        out = acc_ref[...]
        if apply_relu:
            out = jnp.maximum(out, 0.0)
        y_ref[...] = out.astype(y_ref.dtype)


# Single-buffer VMEM budget under which the full WX tensor is kept resident in
# the aggregation kernel (double-buffered by the pipeline -> 2x this in VMEM,
# still comfortably below the 16 MiB v5e scoped default).
_WX_RESIDENT_BYTES = 4 * 1024 * 1024


def rgcn_layer(adj_i8, x_p, w_p, *, apply_relu, out_dtype, tm, tn):
    """One RGCN layer on padded inputs.

    adj_i8: (R, Mp, Np)  int8  dense 0/1 adjacency (padded, prepared once)
    x_p:    (Np, Fin_p)  bf16  source-node features (padded)
    w_p:    (R, Fin_p, Fo_p) bf16 relation weights (padded)
    returns (Mp, Fo_p) in `out_dtype`.
    """
    num_rels, mp, np_ = adj_i8.shape
    _, fin_p, fo_p = w_p.shape
    assert x_p.shape == (np_, fin_p)
    assert mp % tm == 0 and np_ % tn == 0

    # --- WX = X @ W_r  (grid: n outer, r inner -> X tile not re-DMA'd per r) ---
    tk = _pick_tile(fin_p, (512, 256, 128))
    wx = pl.pallas_call(
        _wx_kernel,
        out_shape=jax.ShapeDtypeStruct((num_rels, np_, fo_p), jnp.bfloat16),
        grid_spec=pltpu.PrefetchScalarGridSpec(
            num_scalar_prefetch=0,
            grid=(np_ // tn, num_rels, fin_p // tk),
            in_specs=[
                pl.BlockSpec((tn, tk), lambda n, r, k: (n, k)),
                pl.BlockSpec((1, tk, fo_p), lambda n, r, k: (r, k, 0)),
            ],
            out_specs=pl.BlockSpec((1, tn, fo_p), lambda n, r, k: (r, n, 0)),
            scratch_shapes=[pltpu.VMEM((tn, fo_p), jnp.float32)],
        ),
        compiler_params=pltpu.CompilerParams(
            dimension_semantics=("parallel", "parallel", "arbitrary"),
        ),
    )(x_p, w_p)

    # --- Y = sum_r A_r @ WX_r, tiled over (M, r, N), reductions innermost ---
    wx_resident = (num_rels * np_ * fo_p * 2) <= _WX_RESIDENT_BYTES
    if wx_resident:
        # Constant index_map: WX is DMA'd to VMEM once and stays resident
        # across all M tiles (no per-M-tile re-read).
        wx_spec = pl.BlockSpec((num_rels, np_, fo_p), lambda m, r, n: (0, 0, 0))
    else:
        wx_spec = pl.BlockSpec((1, tn, fo_p), lambda m, r, n: (r, n, 0))

    y = pl.pallas_call(
        functools.partial(_agg_kernel, apply_relu=apply_relu,
                          wx_resident=wx_resident, tn=tn),
        out_shape=jax.ShapeDtypeStruct((mp, fo_p), out_dtype),
        grid_spec=pltpu.PrefetchScalarGridSpec(
            num_scalar_prefetch=0,
            grid=(mp // tm, num_rels, np_ // tn),
            in_specs=[
                pl.BlockSpec((1, tm, tn), lambda m, r, n: (r, m, n)),
                wx_spec,
            ],
            out_specs=pl.BlockSpec((tm, fo_p), lambda m, r, n: (m, 0)),
            scratch_shapes=[pltpu.VMEM((tm, fo_p), jnp.float32)],
        ),
        compiler_params=pltpu.CompilerParams(
            # M tiles are independent (megacore-shardable on v7x);
            # (r, n) are the reduction axes over the resident accumulator.
            dimension_semantics=("parallel", "arbitrary", "arbitrary"),
        ),
    )(adj_i8, wx)
    return y


def _plan_tiles(m, n):
    """Pad M to 32 (int8 sublane pack) and N to 128 (lanes), then pick tiles
    that divide the padded extents exactly (no padding blow-up).  tm is capped
    so the 'parallel' M axis has at least 2 tiles when possible (v7x)."""
    mp = _round_up(m, 32)
    np_ = _round_up(n, 128)
    tm_cap = max(mp // 2, 32) if mp >= 64 else mp
    tm = _pick_tile(mp, tuple(c for c in (512, 256, 128, 64, 32) if c <= tm_cap))
    tn = _pick_tile(np_, (512, 256, 128))
    return mp, np_, tm, tn


def prepare_adjacency_int8(adj, mp, np_):
    """Pad and narrow the dense 0/1 adjacency ONCE, outside the jitted forward
    (avoids an extra A-sized HBM pass per call).  Assumes A values are 0/1."""
    num_rels, m, n = adj.shape
    a = jnp.zeros((num_rels, mp, np_), jnp.int8)
    return a.at[:, :m, :n].set(adj.astype(jnp.int8))


@functools.partial(
    jax.jit,
    static_argnames=("in_dim", "hidden_dim", "out_dim", "m", "n", "tm", "tn"))
def _forward_padded(adj_i8, features, w1_param, w2_param, *,
                    in_dim, hidden_dim, out_dim, m, n, tm, tn):
    num_rels, mp, np_ = adj_i8.shape

    # Flat-view reinterpretation of the (R, out_feat, in_feat) parameter as
    # (R, in_feat, out_feat) — intentional, matches the TVM kernel's flat read.
    w1 = w1_param.reshape(num_rels, in_dim, hidden_dim)
    w2 = w2_param.reshape(num_rels, hidden_dim, out_dim)

    fin_p = _round_up(in_dim, 128)
    hid_p = _round_up(hidden_dim, 128)
    out_p = _round_up(out_dim, 128)

    bf = jnp.bfloat16
    x_p = jnp.zeros((np_, fin_p), bf).at[:n, :in_dim].set(features.astype(bf))
    w1_p = jnp.zeros((num_rels, fin_p, hid_p), bf).at[:, :in_dim, :hidden_dim].set(
        w1.astype(bf))
    w2_p = jnp.zeros((num_rels, hid_p, out_p), bf).at[:, :hidden_dim, :out_dim].set(
        w2.astype(bf))

    # Layer 1: ReLU + bf16 cast fused into the kernel epilogue.
    h = rgcn_layer(adj_i8, x_p, w1_p, apply_relu=True,
                   out_dtype=bf, tm=tm, tn=tn)            # (mp, hid_p) bf16

    # Layer-1 dst nodes are layer-2 src nodes (m == n); re-pad rows if the
    # M and N paddings differ (padded rows/cols are all zero -> no effect).
    if mp == np_:
        h_in = h
    else:
        rows = min(mp, np_)
        h_in = jnp.zeros((np_, hid_p), bf).at[:rows, :].set(h[:rows, :])

    y = rgcn_layer(adj_i8, h_in, w2_p, apply_relu=False,
                   out_dtype=jnp.float32, tm=tm, tn=tn)   # (mp, out_p) f32

    return y[:m, :out_dim]


def rgcn_sparse_tir_tensorcores_forward(adj, features, w1_param, w2_param,
                                        in_dim, hidden_dim, out_dim):
    """Full 2-layer RGCN forward, matching RGCNSparseTIRTensorCores.forward."""
    num_rels, m, n = adj.shape
    mp, np_, tm, tn = _plan_tiles(m, n)
    adj_i8 = prepare_adjacency_int8(adj, mp, np_)   # done outside the jit
    return _forward_padded(adj_i8, features, w1_param, w2_param,
                           in_dim=in_dim, hidden_dim=hidden_dim,
                           out_dim=out_dim, m=m, n=n, tm=tm, tn=tn)


def _reference_forward(adj, features, w1_param, w2_param,
                       in_dim, hidden_dim, out_dim):
    """Pure-JAX reference with the same bf16 quantization points as the kernel."""
    num_rels = adj.shape[0]
    bf = jnp.bfloat16
    a = adj.astype(bf).astype(jnp.float32)
    w1 = w1_param.reshape(num_rels, in_dim, hidden_dim).astype(bf).astype(jnp.float32)
    w2 = w2_param.reshape(num_rels, hidden_dim, out_dim).astype(bf).astype(jnp.float32)

    x = features.astype(bf).astype(jnp.float32)
    wx1 = jnp.einsum("nf,rfg->rng", x, w1).astype(bf).astype(jnp.float32)
    h = jax.nn.relu(jnp.einsum("rmn,rng->mg", a, wx1))
    h = h.astype(bf).astype(jnp.float32)
    wx2 = jnp.einsum("nf,rfg->rng", h, w2).astype(bf).astype(jnp.float32)
    return jnp.einsum("rmn,rng->mg", a, wx2)


if __name__ == "__main__":
    # Small synthetic heterogeneous-graph setup.
    num_nodes = 64        # m == n (dst node count == src node count)
    num_rels = 3
    in_dim = 32
    hidden_dim = 32
    out_dim = 16

    key = jax.random.PRNGKey(0)
    k_adj, k_feat, k_w1, k_w2 = jax.random.split(key, 4)

    # Dense 0/1 adjacency per relation (0 and 1 are exact in bf16/int8).
    adj = (jax.random.uniform(k_adj, (num_rels, num_nodes, num_nodes)) < 0.1)
    adj = adj.astype(jnp.bfloat16)

    features = jax.random.normal(k_feat, (num_nodes, in_dim), dtype=jnp.float32)

    # Parameters with the module's declared shapes: (num_rels, out_feat, in_feat).
    w1_param = (jax.random.normal(k_w1, (num_rels, hidden_dim, in_dim),
                                  dtype=jnp.float32) * 0.1)
    w2_param = (jax.random.normal(k_w2, (num_rels, out_dim, hidden_dim),
                                  dtype=jnp.float32) * 0.1)

    out = rgcn_sparse_tir_tensorcores_forward(
        adj, features, w1_param, w2_param, in_dim, hidden_dim, out_dim)
    out = jax.block_until_ready(out)

    ref = _reference_forward(
        adj, features, w1_param, w2_param, in_dim, hidden_dim, out_dim)
    assert out.shape == (num_nodes, out_dim)
    assert out.dtype == jnp.float32
    assert jnp.allclose(out, ref, rtol=2e-2, atol=2e-2), "mismatch vs reference"

    print("KERNEL_OK")
</pallas_src>

<mosaic_0001>
module attributes {stable_mosaic.version = 11 : i64} {
  func.func @_wx_kernel(%arg0: i32, %arg1: i32, %arg2: i32, %arg3: memref<128x128xbf16, #tpu.memory_space<vmem>>, %arg4: memref<1x128x128xbf16, #tpu.memory_space<vmem>>, %arg5: memref<1x128x128xbf16, #tpu.memory_space<vmem>>, %arg6: memref<128x128xf32, #tpu.memory_space<vmem>>) attributes {dimension_semantics = [#tpu.dimension_semantics<parallel>, #tpu.dimension_semantics<parallel>, #tpu.dimension_semantics<arbitrary>], iteration_bounds = array<i64: 1, 3, 1>, scalar_prefetch = 0 : i64, scratch_operands = 1 : i64, tpu.core_type = #tpu.core_type<tc>, window_params = [{transform_indices = @transform_0, window_bounds = array<i64: 128, 128>}, {transform_indices = @transform_1, window_bounds = array<i64: 1, 128, 128>}, {transform_indices = @transform_2, window_bounds = array<i64: 1, 128, 128>}]} {
    %c0_i32 = arith.constant 0 : i32
    %0 = arith.cmpi eq, %arg2, %c0_i32 : i32
    %1 = arith.extui %0 : i1 to i32
    %c0_i32_0 = arith.constant 0 : i32
    %2 = arith.cmpi ne, %1, %c0_i32_0 : i32
    scf.if %2 {
      %cst_11 = arith.constant 0.000000e+00 : f32
      %13 = vector.broadcast %cst_11 : f32 to vector<128x128xf32>
      %c0_12 = arith.constant 0 : index
      %c0_13 = arith.constant 0 : index
      %14 = vector.load %arg6[%c0_12, %c0_13] : memref<128x128xf32, #tpu.memory_space<vmem>>, vector<128x128xf32>
      tpu.vector_store %arg6[%c0_12, %c0_13], %13 {strides = array<i32>} : memref<128x128xf32, #tpu.memory_space<vmem>>, vector<128x128xf32>,
    } else {
    }
    %c0 = arith.constant 0 : index
    %c0_1 = arith.constant 0 : index
    %3 = vector.load %arg6[%c0, %c0_1] : memref<128x128xf32, #tpu.memory_space<vmem>>, vector<128x128xf32>
    %c0_2 = arith.constant 0 : index
    %c0_3 = arith.constant 0 : index
    %4 = vector.load %arg3[%c0_2, %c0_3] : memref<128x128xbf16, #tpu.memory_space<vmem>>, vector<128x128xbf16>
    %c0_4 = arith.constant 0 : index
    %c0_5 = arith.constant 0 : index
    %c0_6 = arith.constant 0 : index
    %5 = vector.load %arg4[%c0_4, %c0_5, %c0_6] : memref<1x128x128xbf16, #tpu.memory_space<vmem>>, vector<1x128x128xbf16>
    %6 = vector.shape_cast %5 : vector<1x128x128xbf16> to vector<128x128xbf16>
    %cst = arith.constant dense<0.000000e+00> : vector<128x128xf32>
    %7 = tpu.matmul %4, %6, %cst {dimension_numbers = #tpu.dot_dimension_numbers<[1], [0], [0], [1], [0, 0, 1, 1], [], []>} : vector<128x128xbf16>, vector<128x128xbf16>, vector<128x128xf32> -> vector<128x128xf32>
    %8 = arith.addf %3, %7 : vector<128x128xf32>
    %c0_7 = arith.constant 0 : index
    %c0_8 = arith.constant 0 : index
    %9 = vector.load %arg6[%c0_7, %c0_8] : memref<128x128xf32, #tpu.memory_space<vmem>>, vector<128x128xf32>
    tpu.vector_store %arg6[%c0_7, %c0_8], %8 {strides = array<i32>} : memref<128x128xf32, #tpu.memory_space<vmem>>, vector<128x128xf32>,
    %c0_i32_9 = arith.constant 0 : i32
    %10 = arith.cmpi eq, %arg2, %c0_i32_9 : i32
    %11 = arith.extui %10 : i1 to i32
    %c0_i32_10 = arith.constant 0 : i32
    %12 = arith.cmpi ne, %11, %c0_i32_10 : i32
    scf.if %12 {
      %c0_11 = arith.constant 0 : index
      %c0_12 = arith.constant 0 : index
      %13 = vector.load %arg6[%c0_11, %c0_12] : memref<128x128xf32, #tpu.memory_space<vmem>>, vector<128x128xf32>
      %14 = arith.truncf %13 : vector<128x128xf32> to vector<128x128xbf16>
      %c0_13 = arith.constant 0 : index
      %c0_14 = arith.constant 0 : index
      %c0_15 = arith.constant 0 : index
      %15 = vector.load %arg5[%c0_13, %c0_14, %c0_15] : memref<1x128x128xbf16, #tpu.memory_space<vmem>>, vector<1x128x128xbf16>
      %16 = vector.shape_cast %15 : vector<1x128x128xbf16> to vector<128x128xbf16>
      %17 = vector.shape_cast %14 : vector<128x128xbf16> to vector<1x128x128xbf16>
      tpu.vector_store %arg5[%c0_13, %c0_14, %c0_15], %17 {strides = array<i32>} : memref<1x128x128xbf16, #tpu.memory_space<vmem>>, vector<1x128x128xbf16>,
    } else {
    }
    return
  }
  func.func @transform_0(%arg0: i32, %arg1: i32, %arg2: i32) -> (i32, i32) {
    %c0_i32 = arith.constant 0 : i32
    return %arg0, %arg2 : i32, i32
  }
  func.func @transform_1(%arg0: i32, %arg1: i32, %arg2: i32) -> (i32, i32, i32) {
    %c0_i32 = arith.constant 0 : i32
    %c0_i32_0 = arith.constant 0 : i32
    return %arg1, %arg2, %c0_i32 : i32, i32, i32
  }
  func.func @transform_2(%arg0: i32, %arg1: i32, %arg2: i32) -> (i32, i32, i32) {
    %c0_i32 = arith.constant 0 : i32
    %c0_i32_0 = arith.constant 0 : i32
    return %arg1, %arg0, %c0_i32 : i32, i32, i32
  }
}

module attributes {stable_mosaic.version = 11 : i64} {
  func.func @_agg_kernel(%arg0: i32, %arg1: i32, %arg2: i32, %arg3: memref<1x32x128xi8, #tpu.memory_space<vmem>>, %arg4: memref<3x128x128xbf16, #tpu.memory_space<vmem>>, %arg5: memref<32x128xbf16, #tpu.memory_space<vmem>>, %arg6: memref<32x128xf32, #tpu.memory_space<vmem>>) attributes {dimension_semantics = [#tpu.dimension_semantics<parallel>, #tpu.dimension_semantics<arbitrary>, #tpu.dimension_semantics<arbitrary>], iteration_bounds = array<i64: 2, 3, 1>, scalar_prefetch = 0 : i64, scratch_operands = 1 : i64, tpu.core_type = #tpu.core_type<tc>, window_params = [{transform_indices = @transform_0, window_bounds = array<i64: 1, 32, 128>}, {pipeline_mode = #tpu.pipeline_mode<synchronous>, transform_indices = @transform_1, window_bounds = array<i64: 3, 128, 128>}, {transform_indices = @transform_2, window_bounds = array<i64: 32, 128>}]} {
    %c0_i32 = arith.constant 0 : i32
    %0 = arith.cmpi eq, %arg1, %c0_i32 : i32
    %c0_i32_0 = arith.constant 0 : i32
    %1 = arith.cmpi eq, %arg2, %c0_i32_0 : i32
    %2 = arith.andi %0, %1 : i1
    %3 = arith.extui %2 : i1 to i32
    %c0_i32_1 = arith.constant 0 : i32
    %4 = arith.cmpi ne, %3, %c0_i32_1 : i32
    scf.if %4 {
      %cst_11 = arith.constant 0.000000e+00 : f32
      %23 = vector.broadcast %cst_11 : f32 to vector<32x128xf32>
      %c0_12 = arith.constant 0 : index
      %c0_13 = arith.constant 0 : index
      %24 = vector.load %arg6[%c0_12, %c0_13] : memref<32x128xf32, #tpu.memory_space<vmem>>, vector<32x128xf32>
      tpu.vector_store %arg6[%c0_12, %c0_13], %23 {strides = array<i32>} : memref<32x128xf32, #tpu.memory_space<vmem>>, vector<32x128xf32>,
    } else {
    }
    %c0 = arith.constant 0 : index
    %c0_2 = arith.constant 0 : index
    %c0_3 = arith.constant 0 : index
    %5 = vector.load %arg3[%c0, %c0_2, %c0_3] : memref<1x32x128xi8, #tpu.memory_space<vmem>>, vector<1x32x128xi8>
    %6 = vector.shape_cast %5 : vector<1x32x128xi8> to vector<32x128xi8>
    %7 = arith.sitofp %6 : vector<32x128xi8> to vector<32x128xbf16>
    %c128_i32 = arith.constant 128 : i32
    %8 = arith.muli %arg2, %c128_i32 : i32
    %9 = tpu.assume_multiple %8, 128 : i32
    %10 = arith.index_cast %arg1 : i32 to index
    %11 = arith.index_cast %9 : i32 to index
    %c0_4 = arith.constant 0 : index
    %12 = vector.load %arg4[%10, %11, %c0_4] : memref<3x128x128xbf16, #tpu.memory_space<vmem>>, vector<1x128x128xbf16>
    %13 = vector.shape_cast %12 : vector<1x128x128xbf16> to vector<128x128xbf16>
    %c0_5 = arith.constant 0 : index
    %c0_6 = arith.constant 0 : index
    %14 = vector.load %arg6[%c0_5, %c0_6] : memref<32x128xf32, #tpu.memory_space<vmem>>, vector<32x128xf32>
    %cst = arith.constant dense<0.000000e+00> : vector<32x128xf32>
    %15 = tpu.matmul %7, %13, %cst {dimension_numbers = #tpu.dot_dimension_numbers<[1], [0], [0], [1], [0, 0, 1, 1], [], []>} : vector<32x128xbf16>, vector<128x128xbf16>, vector<32x128xf32> -> vector<32x128xf32>
    %16 = arith.addf %14, %15 : vector<32x128xf32>
    %c0_7 = arith.constant 0 : index
    %c0_8 = arith.constant 0 : index
    %17 = vector.load %arg6[%c0_7, %c0_8] : memref<32x128xf32, #tpu.memory_space<vmem>>, vector<32x128xf32>
    tpu.vector_store %arg6[%c0_7, %c0_8], %16 {strides = array<i32>} : memref<32x128xf32, #tpu.memory_space<vmem>>, vector<32x128xf32>,
    %c2_i32 = arith.constant 2 : i32
    %18 = arith.cmpi eq, %arg1, %c2_i32 : i32
    %c0_i32_9 = arith.constant 0 : i32
    %19 = arith.cmpi eq, %arg2, %c0_i32_9 : i32
    %20 = arith.andi %18, %19 : i1
    %21 = arith.extui %20 : i1 to i32
    %c0_i32_10 = arith.constant 0 : i32
    %22 = arith.cmpi ne, %21, %c0_i32_10 : i32
    scf.if %22 {
      %c0_11 = arith.constant 0 : index
      %c0_12 = arith.constant 0 : index
      %23 = vector.load %arg6[%c0_11, %c0_12] : memref<32x128xf32, #tpu.memory_space<vmem>>, vector<32x128xf32>
      %cst_13 = arith.constant 0.000000e+00 : f32
      %24 = vector.broadcast %cst_13 : f32 to vector<32x128xf32>
      %25 = arith.maximumf %23, %24 : vector<32x128xf32>
      %26 = arith.truncf %25 : vector<32x128xf32> to vector<32x128xbf16>
      %c0_14 = arith.constant 0 : index
      %c0_15 = arith.constant 0 : index
      %27 = vector.load %arg5[%c0_14, %c0_15] : memref<32x128xbf16, #tpu.memory_space<vmem>>, vector<32x128xbf16>
      tpu.vector_store %arg5[%c0_14, %c0_15], %26 {strides = array<i32>} : memref<32x128xbf16, #tpu.memory_space<vmem>>, vector<32x128xbf16>,
    } else {
    }
    return
  }
  func.func @transform_0(%arg0: i32, %arg1: i32, %arg2: i32) -> (i32, i32, i32) {
    %c0_i32 = arith.constant 0 : i32
    return %arg1, %arg0, %arg2 : i32, i32, i32
  }
  func.func @transform_1(%arg0: i32, %arg1: i32, %arg2: i32) -> (i32, i32, i32) {
    %c0_i32 = arith.constant 0 : i32
    %c0_i32_0 = arith.constant 0 : i32
    %c0_i32_1 = arith.constant 0 : i32
    %c0_i32_2 = arith.constant 0 : i32
    return %c0_i32, %c0_i32_0, %c0_i32_1 : i32, i32, i32
  }
  func.func @transform_2(%arg0: i32, %arg1: i32, %arg2: i32) -> (i32, i32) {
    %c0_i32 = arith.constant 0 : i32
    %c0_i32_0 = arith.constant 0 : i32
    return %arg0, %c0_i32 : i32, i32
  }
}

module attributes {stable_mosaic.version = 11 : i64} {
  func.func @_agg_kernel(%arg0: i32, %arg1: i32, %arg2: i32, %arg3: memref<1x32x128xi8, #tpu.memory_space<vmem>>, %arg4: memref<3x128x128xbf16, #tpu.memory_space<vmem>>, %arg5: memref<32x128xf32, #tpu.memory_space<vmem>>, %arg6: memref<32x128xf32, #tpu.memory_space<vmem>>) attributes {dimension_semantics = [#tpu.dimension_semantics<parallel>, #tpu.dimension_semantics<arbitrary>, #tpu.dimension_semantics<arbitrary>], iteration_bounds = array<i64: 2, 3, 1>, scalar_prefetch = 0 : i64, scratch_operands = 1 : i64, tpu.core_type = #tpu.core_type<tc>, window_params = [{transform_indices = @transform_0, window_bounds = array<i64: 1, 32, 128>}, {pipeline_mode = #tpu.pipeline_mode<synchronous>, transform_indices = @transform_1, window_bounds = array<i64: 3, 128, 128>}, {transform_indices = @transform_2, window_bounds = array<i64: 32, 128>}]} {
    %c0_i32 = arith.constant 0 : i32
    %0 = arith.cmpi eq, %arg1, %c0_i32 : i32
    %c0_i32_0 = arith.constant 0 : i32
    %1 = arith.cmpi eq, %arg2, %c0_i32_0 : i32
    %2 = arith.andi %0, %1 : i1
    %3 = arith.extui %2 : i1 to i32
    %c0_i32_1 = arith.constant 0 : i32
    %4 = arith.cmpi ne, %3, %c0_i32_1 : i32
    scf.if %4 {
      %cst_11 = arith.constant 0.000000e+00 : f32
      %23 = vector.broadcast %cst_11 : f32 to vector<32x128xf32>
      %c0_12 = arith.constant 0 : index
      %c0_13 = arith.constant 0 : index
      %24 = vector.load %arg6[%c0_12, %c0_13] : memref<32x128xf32, #tpu.memory_space<vmem>>, vector<32x128xf32>
      tpu.vector_store %arg6[%c0_12, %c0_13], %23 {strides = array<i32>} : memref<32x128xf32, #tpu.memory_space<vmem>>, vector<32x128xf32>,
    } else {
    }
    %c0 = arith.constant 0 : index
    %c0_2 = arith.constant 0 : index
    %c0_3 = arith.constant 0 : index
    %5 = vector.load %arg3[%c0, %c0_2, %c0_3] : memref<1x32x128xi8, #tpu.memory_space<vmem>>, vector<1x32x128xi8>
    %6 = vector.shape_cast %5 : vector<1x32x128xi8> to vector<32x128xi8>
    %7 = arith.sitofp %6 : vector<32x128xi8> to vector<32x128xbf16>
    %c128_i32 = arith.constant 128 : i32
    %8 = arith.muli %arg2, %c128_i32 : i32
    %9 = tpu.assume_multiple %8, 128 : i32
    %10 = arith.index_cast %arg1 : i32 to index
    %11 = arith.index_cast %9 : i32 to index
    %c0_4 = arith.constant 0 : index
    %12 = vector.load %arg4[%10, %11, %c0_4] : memref<3x128x128xbf16, #tpu.memory_space<vmem>>, vector<1x128x128xbf16>
    %13 = vector.shape_cast %12 : vector<1x128x128xbf16> to vector<128x128xbf16>
    %c0_5 = arith.constant 0 : index
    %c0_6 = arith.constant 0 : index
    %14 = vector.load %arg6[%c0_5, %c0_6] : memref<32x128xf32, #tpu.memory_space<vmem>>, vector<32x128xf32>
    %cst = arith.constant dense<0.000000e+00> : vector<32x128xf32>
    %15 = tpu.matmul %7, %13, %cst {dimension_numbers = #tpu.dot_dimension_numbers<[1], [0], [0], [1], [0, 0, 1, 1], [], []>} : vector<32x128xbf16>, vector<128x128xbf16>, vector<32x128xf32> -> vector<32x128xf32>
    %16 = arith.addf %14, %15 : vector<32x128xf32>
    %c0_7 = arith.constant 0 : index
    %c0_8 = arith.constant 0 : index
    %17 = vector.load %arg6[%c0_7, %c0_8] : memref<32x128xf32, #tpu.memory_space<vmem>>, vector<32x128xf32>
    tpu.vector_store %arg6[%c0_7, %c0_8], %16 {strides = array<i32>} : memref<32x128xf32, #tpu.memory_space<vmem>>, vector<32x128xf32>,
    %c2_i32 = arith.constant 2 : i32
    %18 = arith.cmpi eq, %arg1, %c2_i32 : i32
    %c0_i32_9 = arith.constant 0 : i32
    %19 = arith.cmpi eq, %arg2, %c0_i32_9 : i32
    %20 = arith.andi %18, %19 : i1
    %21 = arith.extui %20 : i1 to i32
    %c0_i32_10 = arith.constant 0 : i32
    %22 = arith.cmpi ne, %21, %c0_i32_10 : i32
    scf.if %22 {
      %c0_11 = arith.constant 0 : index
      %c0_12 = arith.constant 0 : index
      %23 = vector.load %arg6[%c0_11, %c0_12] : memref<32x128xf32, #tpu.memory_space<vmem>>, vector<32x128xf32>
      %c0_13 = arith.constant 0 : index
      %c0_14 = arith.constant 0 : index
      %24 = vector.load %arg5[%c0_13, %c0_14] : memref<32x128xf32, #tpu.memory_space<vmem>>, vector<32x128xf32>
      tpu.vector_store %arg5[%c0_13, %c0_14], %23 {strides = array<i32>} : memref<32x128xf32, #tpu.memory_space<vmem>>, vector<32x128xf32>,
    } else {
    }
    return
  }
  func.func @transform_0(%arg0: i32, %arg1: i32, %arg2: i32) -> (i32, i32, i32) {
    %c0_i32 = arith.constant 0 : i32
    return %arg1, %arg0, %arg2 : i32, i32, i32
  }
  func.func @transform_1(%arg0: i32, %arg1: i32, %arg2: i32) -> (i32, i32, i32) {
    %c0_i32 = arith.constant 0 : i32
    %c0_i32_0 = arith.constant 0 : i32
    %c0_i32_1 = arith.constant 0 : i32
    %c0_i32_2 = arith.constant 0 : i32
    return %c0_i32, %c0_i32_0, %c0_i32_1 : i32, i32, i32
  }
  func.func @transform_2(%arg0: i32, %arg1: i32, %arg2: i32) -> (i32, i32) {
    %c0_i32 = arith.constant 0 : i32
    %c0_i32_0 = arith.constant 0 : i32
    return %arg0, %c0_i32 : i32, i32
  }
}

</mosaic_0001>

<llo_original>
// kernel: _forward_padded.7
$region0: #{_forward_padded.7}
  #allocation0 [shape = 'u32[]', space=smem, size = 0x4, offset = 0x4, fixed_abs, tag = 'smem constant byte address 0x4 - core index']
  #allocation1 [shape = 'u32[144,128]{1,0:T(1,128)}', space=vmem, size = 0x12000, scoped, tag = 'internal scratch']
  #allocation2 [shape = 'f32[32,128]{1,0:T(8,128)}', space=vmem, size = 0x4000, scoped, tag = 'scratch operand']
  %s0 = inlined_call_operand.vmem [shape: s8[3,64,128], index: 0, kind: input, shape index: {}]
  %s1 = inlined_call_operand.vmem [shape: bf16[3,128,128], index: 1, kind: input, shape index: {}]
  %s2 = inlined_call_operand.vmem [shape: f32[64,128], index: 2, kind: output, shape index: {}]
  %s3 = sld [smem:[#allocation0]]
  $region49: #{_forward_padded.7} parent=0
    _
  %s5 = ssub.s32 1, %s3
  %s6 = scalar_select 0, %s5, %s3
  loop: start=0, step=1, limit=8
  $region2: #{_forward_padded.7} parent=0 // loop_pre_header
    _
  $region3: #{_forward_padded.7} parent=0 // loop_header
    %s8 = sphi 0, %s12
    %p9 = scmp.ge.s32.totalorder %s8, 8
    %s15 = sphi 0, %s34
    %s16 = sphi 0, %s30
    %s17 = sphi 0, %s26
    %s18 = sphi 0, %s15
    %s19 = sphi 0, %s16
    %s20 = sphi 0, %s17
    %s21 = sphi 0, %s18
    %s22 = sphi 0, %s19
    %s23 = sphi 0, %s20
    %s41 = sphi 0, %s43
    %s44 = sphi 0, %s41
    %s45 = sphi 0, %s44
    %s61 = sphi 0, %s45
    %s65 = sphi 0, %s65
    %s67 = sphi 0, %s65
    %s68 = sphi 0, %s67
    %s82 = sphi 0, %s68
    %s88 = sphi 0, %s90
    %s91 = sphi 0, %s88
    %s92 = sphi 0, %s91
    %s108 = sphi 0, %s92
  $region4: #{_forward_padded.7} parent=0 // loop_header_branch
    %11 = sbr.rel (%p9) target = $region8
  $region5: #{_forward_padded.7} parent=0 // loop_body
    %s13 = ssub.s32 %s8, 1
    %s14 = ssub.s32 %s8, 2
    %s24 = sadd.s32 1, %s17
    %p25 = scmp.ge.s32.totalorder %s24, 1
    %s26 = scalar_select %p25, 0, %s24
    %s27 = sadd.s32 1, %s16
    %s28 = scalar_select %p25, %s27, %s16
    %p29 = scmp.ge.s32.totalorder %s28, 3
    %s30 = scalar_select %p29, 0, %s28
    %s31 = sadd.s32 1, %s15
    %s32 = scalar_select %p29, %s31, %s15
    %p33 = scmp.ge.s32.totalorder %s32, 2
    %s34 = scalar_select %p33, 0, %s32
    %s35 = ssub.s32 %s16, %s30
    %s36 = ssub.s32 %s15, %s34
    %s37 = sor.u32 %s35, %s36
    %s38 = ssub.s32 %s17, %s26
    %s39 = sor.u32 %s37, %s38
    %p40 = scmp.eq.s32.totalorder %s39, 0
    %s42 = sadd.s32 %s41, 1
    %s43 = scalar_select %p40, %s41, %s42
    %p46 = pneg %p40
    %p47 = scmp.eq.s32.totalorder %s8, 5
    %p48 = por %p46, %p47
    %p49 = scmp.ne.s32.totalorder %s41, %s44
    %p50 = scmp.eq.s32.totalorder %s8, 0
    %p51 = por %p49, %p50
    %p52 = scmp.ne.s32.totalorder %s41, %s44
    %p53 = scmp.eq.s32.totalorder %s13, 5
    %p54 = por %p52, %p53
    %p55 = scmp.ne.s32.totalorder %s44, %s45
    %p56 = scmp.eq.s32.totalorder %s13, 0
    %p57 = por %p55, %p56
    %p58 = scmp.ne.s32.totalorder %s44, %s45
    %p59 = scmp.eq.s32.totalorder %s14, 5
    %p60 = por %p58, %p59
    %p62 = scmp.ne.s32.totalorder %s45, %s61
    %p63 = scmp.eq.s32.totalorder %s14, 0
    %p64 = por %p62, %p63
    %s66 = sadd.s32 %s65, 1
    %p69 = scmp.eq.s32.totalorder %s8, 5
    %p70 = scmp.ne.s32.totalorder %s65, %s67
    %p71 = scmp.eq.s32.totalorder %s8, 0
    %p72 = por %p70, %p71
    %p73 = scmp.ne.s32.totalorder %s65, %s67
    %p74 = scmp.eq.s32.totalorder %s13, 5
    %p75 = por %p73, %p74
    %p76 = scmp.ne.s32.totalorder %s67, %s68
    %p77 = scmp.eq.s32.totalorder %s13, 0
    %p78 = por %p76, %p77
    %p79 = scmp.ne.s32.totalorder %s67, %s68
    %p80 = scmp.eq.s32.totalorder %s14, 5
    %p81 = por %p79, %p80
    %p83 = scmp.ne.s32.totalorder %s68, %s82
    %p84 = scmp.eq.s32.totalorder %s14, 0
    %p85 = por %p83, %p84
    %s86 = ssub.s32 %s15, %s34
    %p87 = scmp.eq.s32.totalorder %s86, 0
    %s89 = sadd.s32 %s88, 1
    %s90 = scalar_select %p87, %s88, %s89
    %p93 = pneg %p87
    %p94 = scmp.eq.s32.totalorder %s8, 5
    %p95 = por %p93, %p94
    %p96 = scmp.ne.s32.totalorder %s88, %s91
    %p97 = scmp.eq.s32.totalorder %s8, 0
    %p98 = por %p96, %p97
    %p99 = scmp.ne.s32.totalorder %s88, %s91
    %p100 = scmp.eq.s32.totalorder %s13, 5
    %p101 = por %p99, %p100
    %p102 = scmp.ne.s32.totalorder %s91, %s92
    %p103 = scmp.eq.s32.totalorder %s13, 0
    %p104 = por %p102, %p103
    %p105 = scmp.ne.s32.totalorder %s91, %s92
    %p106 = scmp.eq.s32.totalorder %s14, 5
    %p107 = por %p105, %p106
    %p109 = scmp.ne.s32.totalorder %s92, %s108
    %p110 = scmp.eq.s32.totalorder %s14, 0
    %p111 = por %p109, %p110
    %p112 = scmp.le.s32.totalorder 1, %s8
    %p113 = scmp.lt.s32.totalorder %s8, 7
    %p114 = pnand %p112, %p113
    %p115 = pneg %p114
    // Predicated region
    $region9: #{_forward_padded.7} parent=5 // pred_check
      _
    $region10: #{_forward_padded.7} parent=5 // pred_check_branch
      %117 = sbr.rel (%p114) target = $region12
    $region11: #{_forward_padded.7} parent=5 // pred_region
      %s118 = ssub.s32 %s8, 1
      // Predicated region
      $region13: #{_forward_padded.7} parent=11 // pred_check
        %p119 = pneg %p78
      $region14: #{_forward_padded.7} parent=11 // pred_check_branch
        %121 = sbr.rel (%p119) target = $region16
      $region15: #{_forward_padded.7} parent=11 // pred_region
        _
      $region16: #{_forward_padded.7} parent=11 // pred_fallthru
        _
    $region12: #{_forward_padded.7} parent=5 // pred_fallthru
      _
    %p122 = scmp.lt.s32.totalorder %s8, 6
    // Predicated region
    $region17: #{_forward_padded.7} parent=5 // pred_check
      %p123 = pneg %p122
    $region18: #{_forward_padded.7} parent=5 // pred_check_branch
      %125 = sbr.rel (%p123) target = $region20
    $region19: #{_forward_padded.7} parent=5 // pred_region
      // Predicated region
      $region21: #{_forward_padded.7} parent=19 // pred_check
        %p126 = pneg %p51
      $region22: #{_forward_padded.7} parent=19 // pred_check_branch
        %128 = sbr.rel (%p126) target = $region24
      $region23: #{_forward_padded.7} parent=19 // pred_region
        %p129 = scmp.lt.s32.totalorder %s16, 2
        %s130 = scalar_select %p129, %s16, 2
        %p131 = scmp.lt.s32.totalorder %s15, 1
        %s132 = scalar_select %p131, %s15, 1
        %p133 = scmp.lt.s32.totalorder %s17, 0
        %s134 = scalar_select %p133, %s17, 0
        %s135 = sadd.s32 %s134, %s132
        %s136 = smul.addr %s130, 2
        %s137 = sadd.s32 %s135, %s136
        %s138 = smul.addr %s137, 8
        %s139 = scalar_lea.vmem %s0, %s138
      $region24: #{_forward_padded.7} parent=19 // pred_fallthru
        _
    $region20: #{_forward_padded.7} parent=5 // pred_fallthru
      _
    %p140 = scmp.le.s32.totalorder 1, %s8
    %p141 = scmp.lt.s32.totalorder %s8, 7
    %p142 = pnand %p140, %p141
    %p143 = pneg %p142
    // Predicated region
    $region25: #{_forward_padded.7} parent=5 // pred_check
      _
    $region26: #{_forward_padded.7} parent=5 // pred_check_branch
      %145 = sbr.rel (%p142) target = $region28
    $region27: #{_forward_padded.7} parent=5 // pred_region
      %s146 = ssub.s32 %s8, 1
      %p147 = scmp.lt.s32.totalorder %s19, 2
      %s148 = scalar_select %p147, %s19, 2
      %p149 = scmp.lt.s32.totalorder %s18, 1
      %s150 = scalar_select %p149, %s18, 1
      %p151 = scmp.lt.s32.totalorder %s20, 0
      %s152 = scalar_select %p151, %s20, 0
      %s153 = sadd.s32 %s152, %s150
      %s154 = smul.addr %s148, 2
      %s155 = sadd.s32 %s153, %s154
      %s156 = smul.addr %s155, 8
      %s157 = scalar_lea.vmem %s0, %s156
      %p158 = pneg %p57
      %p159 = pneg %p54
      %p160 = pneg %p78
      %p161 = pneg %p75
      %p162 = pneg %p104
      %p163 = pneg %p101
      %s164 = smul.u32 4, %s18
      %p165 = scmp.lt.s32.totalorder %s164, 7
      %s166 = scalar_select %p165, %s164, 7
      %s167 = smul.addr %s166, 8
      %s168 = scalar_lea.vmem %s2, %s167
      %p169 = scmp.lt.s32.totalorder %s19, 2
      %s170 = scalar_select %p169, %s19, 2
      %p171 = scmp.lt.s32.totalorder %s18, 1
      %s172 = scalar_select %p171, %s18, 1
      %p173 = scmp.lt.s32.totalorder %s20, 0
      %s174 = scalar_select %p173, %s20, 0
      %s175 = sadd.s32 %s174, %s172
      %s176 = smul.addr %s170, 2
      %s177 = sadd.s32 %s175, %s176
      %s178 = smul.addr %s177, 8
      %s179 = scalar_lea.vmem %s0, %s178
      %s180 = smul.u32 4, %s18
      %p181 = scmp.lt.s32.totalorder %s180, 7
      %s182 = scalar_select %p181, %s180, 7
      %s183 = smul.addr %s182, 8
      %s184 = scalar_lea.vmem %s2, %s183
      %s185 = smul.u32 4, %s18
      %p187 = scmp.eq.s32.totalorder %s19, 0
      %p188 = scmp.eq.s32.totalorder %s20, 0
      %p189 = pnand %p187, %p188
      %p190 = pneg %p189
      // Predicated region
      $region29: #{_forward_padded.7} parent=27 // pred_check
        _
      $region30: #{_forward_padded.7} parent=27 // pred_check_branch
        %192 = sbr.rel (%p189) target = $region32
      $region31: #{_forward_padded.7} parent=27 // pred_region
        %193 = vst [vmem:[#allocation2] sm:$0xff] 0.0
        %194 = vst [vmem:[#allocation2 + $0x8] sm:$0xff] 0.0
        %195 = vst [vmem:[#allocation2 + $0x10] sm:$0xff] 0.0
        %196 = vst [vmem:[#allocation2 + $0x18] sm:$0xff] 0.0
      $region32: #{_forward_padded.7} parent=27 // pred_fallthru
        _
      %v197 = vld [vmem:[%s179] sm:$0xff]
      %v198 = vunpack.c.l.s8.bf16 %v197
      %v199 = vunpack.c.h.s8.bf16 %v197
      %s200 = smul.u32 %s20, 128
      %s201 = sshra.s32 %s200, 3
      %s202 = sand.u32 %s200, 7
      %s203 = smul.u32 %s19, 16
      %s204 = sadd.s32 %s201, %s203
      %s205 = smul.addr %s204, 4
      %s206 = scalar_lea.vmem %s1, %s205
      %v207 = vld [vmem:[%s206] sm:$0xf]
      %v208 = vld [vmem:[%s206 + $0x4] sm:$0xf]
      %v209 = vld [vmem:[%s206 + $0x8] sm:$0xf]
      %v210 = vld [vmem:[%s206 + $0xc] sm:$0xf]
      %v211 = vld [vmem:[%s206 + $0x10] sm:$0xf]
      %v212 = vld [vmem:[%s206 + $0x14] sm:$0xf]
      %v213 = vld [vmem:[%s206 + $0x18] sm:$0xf]
      %v214 = vld [vmem:[%s206 + $0x1c] sm:$0xf]
      %v215 = vld [vmem:[%s206 + $0x20] sm:$0xf]
      %v216 = vld [vmem:[%s206 + $0x24] sm:$0xf]
      %v217 = vld [vmem:[%s206 + $0x28] sm:$0xf]
      %v218 = vld [vmem:[%s206 + $0x2c] sm:$0xf]
      %v219 = vld [vmem:[%s206 + $0x30] sm:$0xf]
      %v220 = vld [vmem:[%s206 + $0x34] sm:$0xf]
      %v221 = vld [vmem:[%s206 + $0x38] sm:$0xf]
      %v222 = vld [vmem:[%s206 + $0x3c] sm:$0xf]
      %v223 = vld [vmem:[#allocation2] sm:$0xff]
      %v224 = vld [vmem:[#allocation2 + $0x8] sm:$0xff]
      %v225 = vld [vmem:[#allocation2 + $0x10] sm:$0xff]
      %v226 = vld [vmem:[#allocation2 + $0x18] sm:$0xff]
      %v243 = vunpack.c.l.b16 %v207
      %v244 = vunpack.c.l.b16 %v208
      %v245 = vunpack.c.l.b16 %v209
      %v246 = vunpack.c.l.b16 %v210
      %v247 = vunpack.c.l.b16 %v211
      %v248 = vunpack.c.l.b16 %v212
      %v249 = vunpack.c.l.b16 %v213
      %v250 = vunpack.c.l.b16 %v214
      %v251 = vunpack.c.l.b16 %v215
      %v252 = vunpack.c.l.b16 %v216
      %v253 = vunpack.c.l.b16 %v217
      %v254 = vunpack.c.l.b16 %v218
      %v255 = vunpack.c.l.b16 %v219
      %v256 = vunpack.c.l.b16 %v220
      %v257 = vunpack.c.l.b16 %v221
      %v258 = vunpack.c.l.b16 %v222
      %v259 = vpack.c.b16 %v244, %v243
      %v260 = vpack.c.b16 %v246, %v245
      %v261 = vpack.c.b16 %v248, %v247
      %v262 = vpack.c.b16 %v250, %v249
      %v263 = vpack.c.b16 %v252, %v251
      %v264 = vpack.c.b16 %v254, %v253
      %v265 = vpack.c.b16 %v256, %v255
      %v266 = vpack.c.b16 %v258, %v257
      %275 = vmatprep.subr.bf16.mxu0 0
      %276 = vmatpush1.bf16.msra.mxu0 %v259
      %277 = vmatprep.subr.bf16.mxu0 0
      %278 = vmatpush1.bf16.msra.mxu0 %v260
      %279 = vmatprep.subr.bf16.mxu0 0
      %280 = vmatpush1.bf16.msra.mxu0 %v261
      %281 = vmatprep.subr.bf16.mxu0 0
      %282 = vmatpush1.bf16.msra.mxu0 %v262
      %283 = vmatprep.subr.bf16.mxu0 0
      %284 = vmatpush1.bf16.msra.mxu0 %v263
      %285 = vmatprep.subr.bf16.mxu0 0
      %286 = vmatpush1.bf16.msra.mxu0 %v264
      %287 = vmatprep.subr.bf16.mxu0 0
      %288 = vmatpush1.bf16.msra.mxu0 %v265
      %289 = vmatprep.subr.bf16.mxu0 0
      %290 = vmatpush1.bf16.msra.mxu0 %v266
      %291 = vmatprep.subr.bf16.mxu0 0
      %292 = vmatpush1.bf16.msra.mxu0 0
      %293 = vmatprep.subr.bf16.mxu0 0
      %294 = vmatpush1.bf16.msra.mxu0 0
      %295 = vmatprep.subr.bf16.mxu0 0
      %296 = vmatpush1.bf16.msra.mxu0 0
      %297 = vmatprep.subr.bf16.mxu0 0
      %298 = vmatpush1.bf16.msra.mxu0 0
      %299 = vmatprep.subr.bf16.mxu0 0
      %300 = vmatpush1.bf16.msra.mxu0 0
      %301 = vmatprep.subr.bf16.mxu0 0
      %302 = vmatpush1.bf16.msra.mxu0 0
      %303 = vmatprep.subr.bf16.mxu0 0
      %304 = vmatpush1.bf16.msra.mxu0 0
      %305 = vmatprep.subr.bf16.mxu0 0
      %306 = vmatpush1.bf16.msra.mxu0 0
      %307 = vmatprep.mubr.bf16.mxu0 0
      %308 = vmatmul.mubr.bf16.gmra.mrb[0].mxu0 %v198
      %v309 = vpop.f32.mrb[0].mxu0
      %v310 = vadd.f32 0.0, %v309
      %v311 = vpop.f32.mrb[0].mxu0
      %v312 = vpop.f32.mrb[0].mxu0
      %v313 = vadd.f32 0.0, %v312
      %v314 = vpop.f32.mrb[0].mxu0
      %315 = vmatprep.mubr.bf16.mxu0 0
      %316 = vmatmul.mubr.bf16.gmra.mrb[0].mxu0 %v199
      %v317 = vpop.f32.mrb[0].mxu0
      %v318 = vadd.f32 0.0, %v317
      %v319 = vpop.f32.mrb[0].mxu0
      %v320 = vpop.f32.mrb[0].mxu0
      %v321 = vadd.f32 0.0, %v320
      %v322 = vpop.f32.mrb[0].mxu0
      %323 = vdwg.mxu0
      %v324 = vadd.f32 %v223, %v310
      %v325 = vadd.f32 %v224, %v313
      %v326 = vadd.f32 %v225, %v318
      %v327 = vadd.f32 %v226, %v321
      %328 = vst [vmem:[#allocation2] sm:$0xff] %v324
      %329 = vst [vmem:[#allocation2 + $0x8] sm:$0xff] %v325
      %330 = vst [vmem:[#allocation2 + $0x10] sm:$0xff] %v326
      %331 = vst [vmem:[#allocation2 + $0x18] sm:$0xff] %v327
      %p332 = scmp.eq.s32.totalorder %s19, 2
      %p333 = pnand %p332, %p188
      %p334 = pneg %p333
      // Predicated region
      $region33: #{_forward_padded.7} parent=27 // pred_check
        _
      $region34: #{_forward_padded.7} parent=27 // pred_check_branch
        %336 = sbr.rel (%p333) target = $region36
      $region35: #{_forward_padded.7} parent=27 // pred_region
        %v337 = vld [vmem:[#allocation2] sm:$0xff]
        %v338 = vld [vmem:[#allocation2 + $0x8] sm:$0xff]
        %v339 = vld [vmem:[#allocation2 + $0x10] sm:$0xff]
        %v340 = vld [vmem:[#allocation2 + $0x18] sm:$0xff]
        %341 = vst [vmem:[%s184] sm:$0xff] %v337
        %342 = vst [vmem:[%s184 + $0x8] sm:$0xff] %v338
        %343 = vst [vmem:[%s184 + $0x10] sm:$0xff] %v339
        %344 = vst [vmem:[%s184 + $0x18] sm:$0xff] %v340
      $region36: #{_forward_padded.7} parent=27 // pred_fallthru
        _
      %s345 = smul.u32 4, %s18
      %p346 = scmp.lt.s32.totalorder %s345, 7
      %s347 = scalar_select %p346, %s345, 7
      %s348 = smul.addr %s347, 8
      %s349 = scalar_lea.vmem %s2, %s348
      // Predicated region
      $region37: #{_forward_padded.7} parent=27 // pred_check
        %p350 = pneg %p101
      $region38: #{_forward_padded.7} parent=27 // pred_check_branch
        %352 = sbr.rel (%p350) target = $region40
      $region39: #{_forward_padded.7} parent=27 // pred_region
        %s353 = smul.u32 4, %s18
      $region40: #{_forward_padded.7} parent=27 // pred_fallthru
        _
    $region28: #{_forward_padded.7} parent=5 // pred_fallthru
      _
    %p354 = scmp.le.s32.totalorder 2, %s8
    // Predicated region
    $region41: #{_forward_padded.7} parent=5 // pred_check
      %p355 = pneg %p354
    $region42: #{_forward_padded.7} parent=5 // pred_check_branch
      %357 = sbr.rel (%p355) target = $region44
    $region43: #{_forward_padded.7} parent=5 // pred_region
      %s358 = ssub.s32 %s8, 2
      // Predicated region
      $region45: #{_forward_padded.7} parent=43 // pred_check
        %p359 = pneg %p107
      $region46: #{_forward_padded.7} parent=43 // pred_check_branch
        %361 = sbr.rel (%p359) target = $region48
      $region47: #{_forward_padded.7} parent=43 // pred_region
        %s362 = smul.u32 4, %s21
        %p363 = scmp.lt.s32.totalorder %s362, 7
        %s364 = scalar_select %p363, %s362, 7
        %s365 = smul.addr %s364, 8
        %s366 = scalar_lea.vmem %s2, %s365
      $region48: #{_forward_padded.7} parent=43 // pred_fallthru
        _
    $region44: #{_forward_padded.7} parent=5 // pred_fallthru
      _
  $region6: #{_forward_padded.7} parent=0 // loop_footer
    %s12 = sadd.s32 1, %s8
  $region7: #{_forward_padded.7} parent=0 // loop_footer_branch
    %7 = sbr.rel target = $region3
  $region8: #{_forward_padded.7} parent=0 // loop_exit
    _

// kernel: _forward_padded.5
$region0: #{_forward_padded.5}
  #allocation0 [shape = 'u32[]', space=smem, size = 0x4, offset = 0x4, fixed_abs, tag = 'smem constant byte address 0x4 - core index']
  #allocation1 [shape = 'u32[144,128]{1,0:T(1,128)}', space=vmem, size = 0x12000, scoped, tag = 'internal scratch']
  #allocation2 [shape = 'f32[32,128]{1,0:T(8,128)}', space=vmem, size = 0x4000, scoped, tag = 'scratch operand']
  %s0 = inlined_call_operand.vmem [shape: s8[3,64,128], index: 0, kind: input, shape index: {}]
  %s1 = inlined_call_operand.vmem [shape: bf16[3,128,128], index: 1, kind: input, shape index: {}]
  %s2 = inlined_call_operand.vmem [shape: bf16[64,128], index: 2, kind: output, shape index: {}]
  %s3 = sld [smem:[#allocation0]]
  $region49: #{_forward_padded.5} parent=0
    _
  %s5 = ssub.s32 1, %s3
  %s6 = scalar_select 0, %s5, %s3
  loop: start=0, step=1, limit=8
  $region2: #{_forward_padded.5} parent=0 // loop_pre_header
    _
  $region3: #{_forward_padded.5} parent=0 // loop_header
    %s8 = sphi 0, %s12
    %p9 = scmp.ge.s32.totalorder %s8, 8
    %s15 = sphi 0, %s34
    %s16 = sphi 0, %s30
    %s17 = sphi 0, %s26
    %s18 = sphi 0, %s15
    %s19 = sphi 0, %s16
    %s20 = sphi 0, %s17
    %s21 = sphi 0, %s18
    %s22 = sphi 0, %s19
    %s23 = sphi 0, %s20
    %s41 = sphi 0, %s43
    %s44 = sphi 0, %s41
    %s45 = sphi 0, %s44
    %s61 = sphi 0, %s45
    %s65 = sphi 0, %s65
    %s67 = sphi 0, %s65
    %s68 = sphi 0, %s67
    %s82 = sphi 0, %s68
    %s88 = sphi 0, %s90
    %s91 = sphi 0, %s88
    %s92 = sphi 0, %s91
    %s108 = sphi 0, %s92
  $region4: #{_forward_padded.5} parent=0 // loop_header_branch
    %11 = sbr.rel (%p9) target = $region8
  $region5: #{_forward_padded.5} parent=0 // loop_body
    %s13 = ssub.s32 %s8, 1
    %s14 = ssub.s32 %s8, 2
    %s24 = sadd.s32 1, %s17
    %p25 = scmp.ge.s32.totalorder %s24, 1
    %s26 = scalar_select %p25, 0, %s24
    %s27 = sadd.s32 1, %s16
    %s28 = scalar_select %p25, %s27, %s16
    %p29 = scmp.ge.s32.totalorder %s28, 3
    %s30 = scalar_select %p29, 0, %s28
    %s31 = sadd.s32 1, %s15
    %s32 = scalar_select %p29, %s31, %s15
    %p33 = scmp.ge.s32.totalorder %s32, 2
    %s34 = scalar_select %p33, 0, %s32
    %s35 = ssub.s32 %s16, %s30
    %s36 = ssub.s32 %s15, %s34
    %s37 = sor.u32 %s35, %s36
    %s38 = ssub.s32 %s17, %s26
    %s39 = sor.u32 %s37, %s38
    %p40 = scmp.eq.s32.totalorder %s39, 0
    %s42 = sadd.s32 %s41, 1
    %s43 = scalar_select %p40, %s41, %s42
    %p46 = pneg %p40
    %p47 = scmp.eq.s32.totalorder %s8, 5
    %p48 = por %p46, %p47
    %p49 = scmp.ne.s32.totalorder %s41, %s44
    %p50 = scmp.eq.s32.totalorder %s8, 0
    %p51 = por %p49, %p50
    %p52 = scmp.ne.s32.totalorder %s41, %s44
    %p53 = scmp.eq.s32.totalorder %s13, 5
    %p54 = por %p52, %p53
    %p55 = scmp.ne.s32.totalorder %s44, %s45
    %p56 = scmp.eq.s32.totalorder %s13, 0
    %p57 = por %p55, %p56
    %p58 = scmp.ne.s32.totalorder %s44, %s45
    %p59 = scmp.eq.s32.totalorder %s14, 5
    %p60 = por %p58, %p59
    %p62 = scmp.ne.s32.totalorder %s45, %s61
    %p63 = scmp.eq.s32.totalorder %s14, 0
    %p64 = por %p62, %p63
    %s66 = sadd.s32 %s65, 1
    %p69 = scmp.eq.s32.totalorder %s8, 5
    %p70 = scmp.ne.s32.totalorder %s65, %s67
    %p71 = scmp.eq.s32.totalorder %s8, 0
    %p72 = por %p70, %p71
    %p73 = scmp.ne.s32.totalorder %s65, %s67
    %p74 = scmp.eq.s32.totalorder %s13, 5
    %p75 = por %p73, %p74
    %p76 = scmp.ne.s32.totalorder %s67, %s68
    %p77 = scmp.eq.s32.totalorder %s13, 0
    %p78 = por %p76, %p77
    %p79 = scmp.ne.s32.totalorder %s67, %s68
    %p80 = scmp.eq.s32.totalorder %s14, 5
    %p81 = por %p79, %p80
    %p83 = scmp.ne.s32.totalorder %s68, %s82
    %p84 = scmp.eq.s32.totalorder %s14, 0
    %p85 = por %p83, %p84
    %s86 = ssub.s32 %s15, %s34
    %p87 = scmp.eq.s32.totalorder %s86, 0
    %s89 = sadd.s32 %s88, 1
    %s90 = scalar_select %p87, %s88, %s89
    %p93 = pneg %p87
    %p94 = scmp.eq.s32.totalorder %s8, 5
    %p95 = por %p93, %p94
    %p96 = scmp.ne.s32.totalorder %s88, %s91
    %p97 = scmp.eq.s32.totalorder %s8, 0
    %p98 = por %p96, %p97
    %p99 = scmp.ne.s32.totalorder %s88, %s91
    %p100 = scmp.eq.s32.totalorder %s13, 5
    %p101 = por %p99, %p100
    %p102 = scmp.ne.s32.totalorder %s91, %s92
    %p103 = scmp.eq.s32.totalorder %s13, 0
    %p104 = por %p102, %p103
    %p105 = scmp.ne.s32.totalorder %s91, %s92
    %p106 = scmp.eq.s32.totalorder %s14, 5
    %p107 = por %p105, %p106
    %p109 = scmp.ne.s32.totalorder %s92, %s108
    %p110 = scmp.eq.s32.totalorder %s14, 0
    %p111 = por %p109, %p110
    %p112 = scmp.le.s32.totalorder 1, %s8
    %p113 = scmp.lt.s32.totalorder %s8, 7
    %p114 = pnand %p112, %p113
    %p115 = pneg %p114
    // Predicated region
    $region9: #{_forward_padded.5} parent=5 // pred_check
      _
    $region10: #{_forward_padded.5} parent=5 // pred_check_branch
      %117 = sbr.rel (%p114) target = $region12
    $region11: #{_forward_padded.5} parent=5 // pred_region
      %s118 = ssub.s32 %s8, 1
      // Predicated region
      $region13: #{_forward_padded.5} parent=11 // pred_check
        %p119 = pneg %p78
      $region14: #{_forward_padded.5} parent=11 // pred_check_branch
        %121 = sbr.rel (%p119) target = $region16
      $region15: #{_forward_padded.5} parent=11 // pred_region
        _
      $region16: #{_forward_padded.5} parent=11 // pred_fallthru
        _
    $region12: #{_forward_padded.5} parent=5 // pred_fallthru
      _
    %p122 = scmp.lt.s32.totalorder %s8, 6
    // Predicated region
    $region17: #{_forward_padded.5} parent=5 // pred_check
      %p123 = pneg %p122
    $region18: #{_forward_padded.5} parent=5 // pred_check_branch
      %125 = sbr.rel (%p123) target = $region20
    $region19: #{_forward_padded.5} parent=5 // pred_region
      // Predicated region
      $region21: #{_forward_padded.5} parent=19 // pred_check
        %p126 = pneg %p51
      $region22: #{_forward_padded.5} parent=19 // pred_check_branch
        %128 = sbr.rel (%p126) target = $region24
      $region23: #{_forward_padded.5} parent=19 // pred_region
        %p129 = scmp.lt.s32.totalorder %s16, 2
        %s130 = scalar_select %p129, %s16, 2
        %p131 = scmp.lt.s32.totalorder %s15, 1
        %s132 = scalar_select %p131, %s15, 1
        %p133 = scmp.lt.s32.totalorder %s17, 0
        %s134 = scalar_select %p133, %s17, 0
        %s135 = sadd.s32 %s134, %s132
        %s136 = smul.addr %s130, 2
        %s137 = sadd.s32 %s135, %s136
        %s138 = smul.addr %s137, 8
        %s139 = scalar_lea.vmem %s0, %s138
      $region24: #{_forward_padded.5} parent=19 // pred_fallthru
        _
    $region20: #{_forward_padded.5} parent=5 // pred_fallthru
      _
    %p140 = scmp.le.s32.totalorder 1, %s8
    %p141 = scmp.lt.s32.totalorder %s8, 7
    %p142 = pnand %p140, %p141
    %p143 = pneg %p142
    // Predicated region
    $region25: #{_forward_padded.5} parent=5 // pred_check
      _
    $region26: #{_forward_padded.5} parent=5 // pred_check_branch
      %145 = sbr.rel (%p142) target = $region28
    $region27: #{_forward_padded.5} parent=5 // pred_region
      %s146 = ssub.s32 %s8, 1
      %p147 = scmp.lt.s32.totalorder %s19, 2
      %s148 = scalar_select %p147, %s19, 2
      %p149 = scmp.lt.s32.totalorder %s18, 1
      %s150 = scalar_select %p149, %s18, 1
      %p151 = scmp.lt.s32.totalorder %s20, 0
      %s152 = scalar_select %p151, %s20, 0
      %s153 = sadd.s32 %s152, %s150
      %s154 = smul.addr %s148, 2
      %s155 = sadd.s32 %s153, %s154
      %s156 = smul.addr %s155, 8
      %s157 = scalar_lea.vmem %s0, %s156
      %p158 = pneg %p57
      %p159 = pneg %p54
      %p160 = pneg %p78
      %p161 = pneg %p75
      %p162 = pneg %p104
      %p163 = pneg %p101
      %s164 = smul.u32 4, %s18
      %p165 = scmp.lt.s32.totalorder %s164, 7
      %s166 = scalar_select %p165, %s164, 7
      %s167 = smul.addr %s166, 4
      %s168 = scalar_lea.vmem %s2, %s167
      %p169 = scmp.lt.s32.totalorder %s19, 2
      %s170 = scalar_select %p169, %s19, 2
      %p171 = scmp.lt.s32.totalorder %s18, 1
      %s172 = scalar_select %p171, %s18, 1
      %p173 = scmp.lt.s32.totalorder %s20, 0
      %s174 = scalar_select %p173, %s20, 0
      %s175 = sadd.s32 %s174, %s172
      %s176 = smul.addr %s170, 2
      %s177 = sadd.s32 %s175, %s176
      %s178 = smul.addr %s177, 8
      %s179 = scalar_lea.vmem %s0, %s178
      %s180 = smul.u32 4, %s18
      %p181 = scmp.lt.s32.totalorder %s180, 7
      %s182 = scalar_select %p181, %s180, 7
      %s183 = smul.addr %s182, 4
      %s184 = scalar_lea.vmem %s2, %s183
      %s185 = smul.u32 4, %s18
      %p187 = scmp.eq.s32.totalorder %s19, 0
      %p188 = scmp.eq.s32.totalorder %s20, 0
      %p189 = pnand %p187, %p188
      %p190 = pneg %p189
      // Predicated region
      $region29: #{_forward_padded.5} parent=27 // pred_check
        _
      $region30: #{_forward_padded.5} parent=27 // pred_check_branch
        %192 = sbr.rel (%p189) target = $region32
      $region31: #{_forward_padded.5} parent=27 // pred_region
        %193 = vst [vmem:[#allocation2] sm:$0xff] 0.0
        %194 = vst [vmem:[#allocation2 + $0x8] sm:$0xff] 0.0
        %195 = vst [vmem:[#allocation2 + $0x10] sm:$0xff] 0.0
        %196 = vst [vmem:[#allocation2 + $0x18] sm:$0xff] 0.0
      $region32: #{_forward_padded.5} parent=27 // pred_fallthru
        _
      %v197 = vld [vmem:[%s179] sm:$0xff]
      %v198 = vunpack.c.l.s8.bf16 %v197
      %v199 = vunpack.c.h.s8.bf16 %v197
      %s200 = smul.u32 %s20, 128
      %s201 = sshra.s32 %s200, 3
      %s202 = sand.u32 %s200, 7
      %s203 = smul.u32 %s19, 16
      %s204 = sadd.s32 %s201, %s203
      %s205 = smul.addr %s204, 4
      %s206 = scalar_lea.vmem %s1, %s205
      %v207 = vld [vmem:[%s206] sm:$0xf]
      %v208 = vld [vmem:[%s206 + $0x4] sm:$0xf]
      %v209 = vld [vmem:[%s206 + $0x8] sm:$0xf]
      %v210 = vld [vmem:[%s206 + $0xc] sm:$0xf]
      %v211 = vld [vmem:[%s206 + $0x10] sm:$0xf]
      %v212 = vld [vmem:[%s206 + $0x14] sm:$0xf]
      %v213 = vld [vmem:[%s206 + $0x18] sm:$0xf]
      %v214 = vld [vmem:[%s206 + $0x1c] sm:$0xf]
      %v215 = vld [vmem:[%s206 + $0x20] sm:$0xf]
      %v216 = vld [vmem:[%s206 + $0x24] sm:$0xf]
      %v217 = vld [vmem:[%s206 + $0x28] sm:$0xf]
      %v218 = vld [vmem:[%s206 + $0x2c] sm:$0xf]
      %v219 = vld [vmem:[%s206 + $0x30] sm:$0xf]
      %v220 = vld [vmem:[%s206 + $0x34] sm:$0xf]
      %v221 = vld [vmem:[%s206 + $0x38] sm:$0xf]
      %v222 = vld [vmem:[%s206 + $0x3c] sm:$0xf]
      %v223 = vld [vmem:[#allocation2] sm:$0xff]
      %v224 = vld [vmem:[#allocation2 + $0x8] sm:$0xff]
      %v225 = vld [vmem:[#allocation2 + $0x10] sm:$0xff]
      %v226 = vld [vmem:[#allocation2 + $0x18] sm:$0xff]
      %v243 = vunpack.c.l.b16 %v207
      %v244 = vunpack.c.l.b16 %v208
      %v245 = vunpack.c.l.b16 %v209
      %v246 = vunpack.c.l.b16 %v210
      %v247 = vunpack.c.l.b16 %v211
      %v248 = vunpack.c.l.b16 %v212
      %v249 = vunpack.c.l.b16 %v213
      %v250 = vunpack.c.l.b16 %v214
      %v251 = vunpack.c.l.b16 %v215
      %v252 = vunpack.c.l.b16 %v216
      %v253 = vunpack.c.l.b16 %v217
      %v254 = vunpack.c.l.b16 %v218
      %v255 = vunpack.c.l.b16 %v219
      %v256 = vunpack.c.l.b16 %v220
      %v257 = vunpack.c.l.b16 %v221
      %v258 = vunpack.c.l.b16 %v222
      %v259 = vpack.c.b16 %v244, %v243
      %v260 = vpack.c.b16 %v246, %v245
      %v261 = vpack.c.b16 %v248, %v247
      %v262 = vpack.c.b16 %v250, %v249
      %v263 = vpack.c.b16 %v252, %v251
      %v264 = vpack.c.b16 %v254, %v253
      %v265 = vpack.c.b16 %v256, %v255
      %v266 = vpack.c.b16 %v258, %v257
      %275 = vmatprep.subr.bf16.mxu0 0
      %276 = vmatpush1.bf16.msra.mxu0 %v259
      %277 = vmatprep.subr.bf16.mxu0 0
      %278 = vmatpush1.bf16.msra.mxu0 %v260
      %279 = vmatprep.subr.bf16.mxu0 0
      %280 = vmatpush1.bf16.msra.mxu0 %v261
      %281 = vmatprep.subr.bf16.mxu0 0
      %282 = vmatpush1.bf16.msra.mxu0 %v262
      %283 = vmatprep.subr.bf16.mxu0 0
      %284 = vmatpush1.bf16.msra.mxu0 %v263
      %285 = vmatprep.subr.bf16.mxu0 0
      %286 = vmatpush1.bf16.msra.mxu0 %v264
      %287 = vmatprep.subr.bf16.mxu0 0
      %288 = vmatpush1.bf16.msra.mxu0 %v265
      %289 = vmatprep.subr.bf16.mxu0 0
      %290 = vmatpush1.bf16.msra.mxu0 %v266
      %291 = vmatprep.subr.bf16.mxu0 0
      %292 = vmatpush1.bf16.msra.mxu0 0
      %293 = vmatprep.subr.bf16.mxu0 0
      %294 = vmatpush1.bf16.msra.mxu0 0
      %295 = vmatprep.subr.bf16.mxu0 0
      %296 = vmatpush1.bf16.msra.mxu0 0
      %297 = vmatprep.subr.bf16.mxu0 0
      %298 = vmatpush1.bf16.msra.mxu0 0
      %299 = vmatprep.subr.bf16.mxu0 0
      %300 = vmatpush1.bf16.msra.mxu0 0
      %301 = vmatprep.subr.bf16.mxu0 0
      %302 = vmatpush1.bf16.msra.mxu0 0
      %303 = vmatprep.subr.bf16.mxu0 0
      %304 = vmatpush1.bf16.msra.mxu0 0
      %305 = vmatprep.subr.bf16.mxu0 0
      %306 = vmatpush1.bf16.msra.mxu0 0
      %307 = vmatprep.mubr.bf16.mxu0 0
      %308 = vmatmul.mubr.bf16.gmra.mrb[0].mxu0 %v198
      %v309 = vpop.f32.mrb[0].mxu0
      %v310 = vadd.f32 0.0, %v309
      %v311 = vpop.f32.mrb[0].mxu0
      %v312 = vpop.f32.mrb[0].mxu0
      %v313 = vadd.f32 0.0, %v312
      %v314 = vpop.f32.mrb[0].mxu0
      %315 = vmatprep.mubr.bf16.mxu0 0
      %316 = vmatmul.mubr.bf16.gmra.mrb[0].mxu0 %v199
      %v317 = vpop.f32.mrb[0].mxu0
      %v318 = vadd.f32 0.0, %v317
      %v319 = vpop.f32.mrb[0].mxu0
      %v320 = vpop.f32.mrb[0].mxu0
      %v321 = vadd.f32 0.0, %v320
      %v322 = vpop.f32.mrb[0].mxu0
      %323 = vdwg.mxu0
      %v324 = vadd.f32 %v223, %v310
      %v325 = vadd.f32 %v224, %v313
      %v326 = vadd.f32 %v225, %v318
      %v327 = vadd.f32 %v226, %v321
      %328 = vst [vmem:[#allocation2] sm:$0xff] %v324
      %329 = vst [vmem:[#allocation2 + $0x8] sm:$0xff] %v325
      %330 = vst [vmem:[#allocation2 + $0x10] sm:$0xff] %v326
      %331 = vst [vmem:[#allocation2 + $0x18] sm:$0xff] %v327
      %p332 = scmp.eq.s32.totalorder %s19, 2
      %p333 = pnand %p332, %p188
      %p334 = pneg %p333
      // Predicated region
      $region33: #{_forward_padded.5} parent=27 // pred_check
        _
      $region34: #{_forward_padded.5} parent=27 // pred_check_branch
        %336 = sbr.rel (%p333) target = $region36
      $region35: #{_forward_padded.5} parent=27 // pred_region
        %v337 = vld [vmem:[#allocation2] sm:$0xff]
        %v338 = vld [vmem:[#allocation2 + $0x8] sm:$0xff]
        %v339 = vld [vmem:[#allocation2 + $0x10] sm:$0xff]
        %v340 = vld [vmem:[#allocation2 + $0x18] sm:$0xff]
        %v341 = vmax.f32 %v337, 0.0
        %v342 = vmax.f32 %v338, 0.0
        %v343 = vmax.f32 %v339, 0.0
        %v344 = vmax.f32 %v340, 0.0
        %v345 = vpack.c.bf16 %v342, %v341
        %v346 = vpack.c.bf16 %v344, %v343
        %v349 = vunpack.c.l.b16 %v345
        %v350 = vunpack.c.h.b16 %v345
        %v351 = vunpack.c.l.b16 %v346
        %v352 = vunpack.c.h.b16 %v346
        %v353 = vpack.c.b16 %v349, %v349
        %v354 = vpack.c.b16 %v350, %v350
        %v355 = vpack.c.b16 %v351, %v351
        %v356 = vpack.c.b16 %v352, %v352
        %361 = vst [vmem:[%s184] sm:$0xf] %v353
        %362 = vst [vmem:[%s184 + $0x4] sm:$0xf] %v354
        %363 = vst [vmem:[%s184 + $0x8] sm:$0xf] %v355
        %364 = vst [vmem:[%s184 + $0xc] sm:$0xf] %v356
      $region36: #{_forward_padded.5} parent=27 // pred_fallthru
        _
      %s365 = smul.u32 4, %s18
      %p366 = scmp.lt.s32.totalorder %s365, 7
      %s367 = scalar_select %p366, %s365, 7
      %s368 = smul.addr %s367, 4
      %s369 = scalar_lea.vmem %s2, %s368
      // Predicated region
      $region37: #{_forward_padded.5} parent=27 // pred_check
        %p370 = pneg %p101
      $region38: #{_forward_padded.5} parent=27 // pred_check_branch
        %372 = sbr.rel (%p370) target = $region40
      $region39: #{_forward_padded.5} parent=27 // pred_region
        %s373 = smul.u32 4, %s18
      $region40: #{_forward_padded.5} parent=27 // pred_fallthru
        _
    $region28: #{_forward_padded.5} parent=5 // pred_fallthru
      _
    %p374 = scmp.le.s32.totalorder 2, %s8
    // Predicated region
    $region41: #{_forward_padded.5} parent=5 // pred_check
      %p375 = pneg %p374
    $region42: #{_forward_padded.5} parent=5 // pred_check_branch
      %377 = sbr.rel (%p375) target = $region44
    $region43: #{_forward_padded.5} parent=5 // pred_region
      %s378 = ssub.s32 %s8, 2
      // Predicated region
      $region45: #{_forward_padded.5} parent=43 // pred_check
        %p379 = pneg %p107
      $region46: #{_forward_padded.5} parent=43 // pred_check_branch
        %381 = sbr.rel (%p379) target = $region48
      $region47: #{_forward_padded.5} parent=43 // pred_region
        %s382 = smul.u32 4, %s21
        %p383 = scmp.lt.s32.totalorder %s382, 7
        %s384 = scalar_select %p383, %s382, 7
        %s385 = smul.addr %s384, 4
        %s386 = scalar_lea.vmem %s2, %s385
      $region48: #{_forward_padded.5} parent=43 // pred_fallthru
        _
    $region44: #{_forward_padded.5} parent=5 // pred_fallthru
      _
  $region6: #{_forward_padded.5} parent=0 // loop_footer
    %s12 = sadd.s32 1, %s8
  $region7: #{_forward_padded.5} parent=0 // loop_footer_branch
    %7 = sbr.rel target = $region3
  $region8: #{_forward_padded.5} parent=0 // loop_exit
    _

// kernel: _forward_padded.4
$region0: #{_forward_padded.4}
  #allocation0 [shape = 'u32[]', space=smem, size = 0x4, offset = 0x4, fixed_abs, tag = 'smem constant byte address 0x4 - core index']
  #allocation1 [shape = 'u32[144,128]{1,0:T(1,128)}', space=vmem, size = 0x12000, scoped, tag = 'internal scratch']
  #allocation2 [shape = 'f32[128,128]{1,0:T(8,128)}', space=vmem, size = 0x10000, scoped, tag = 'scratch operand']
  %s0 = inlined_call_operand.vmem [shape: bf16[128,128], index: 0, kind: input, shape index: {}]
  %s1 = inlined_call_operand.vmem [shape: bf16[3,128,128], index: 1, kind: input, shape index: {}]
  %s2 = inlined_call_operand.vmem [shape: bf16[3,128,128], index: 2, kind: output, shape index: {}]
  %s3 = sld [smem:[#allocation0]]
  $region49: #{_forward_padded.4} parent=0
    _
  %s5 = ssub.s32 1, %s3
  %s6 = scalar_select 0, %s5, %s3
  loop: start=0, step=1, limit=5
  $region2: #{_forward_padded.4} parent=0 // loop_pre_header
    _
  $region3: #{_forward_padded.4} parent=0 // loop_header
    %s8 = sphi 0, %s12
    %p9 = scmp.ge.s32.totalorder %s8, 5
    %s15 = sphi 0, %s34
    %s16 = sphi 0, %s30
    %s17 = sphi 0, %s26
    %s18 = sphi 0, %s15
    %s19 = sphi 0, %s16
    %s20 = sphi 0, %s17
    %s21 = sphi 0, %s18
    %s22 = sphi 0, %s19
    %s23 = sphi 0, %s20
    %s39 = sphi 0, %s41
    %s42 = sphi 0, %s39
    %s43 = sphi 0, %s42
    %s59 = sphi 0, %s43
    %s67 = sphi 0, %s69
    %s70 = sphi 0, %s67
    %s71 = sphi 0, %s70
    %s87 = sphi 0, %s71
    %s95 = sphi 0, %s97
    %s98 = sphi 0, %s95
    %s99 = sphi 0, %s98
    %s115 = sphi 0, %s99
  $region4: #{_forward_padded.4} parent=0 // loop_header_branch
    %11 = sbr.rel (%p9) target = $region8
  $region5: #{_forward_padded.4} parent=0 // loop_body
    %s13 = ssub.s32 %s8, 1
    %s14 = ssub.s32 %s8, 2
    %s24 = sadd.s32 1, %s17
    %p25 = scmp.ge.s32.totalorder %s24, 1
    %s26 = scalar_select %p25, 0, %s24
    %s27 = sadd.s32 1, %s16
    %s28 = scalar_select %p25, %s27, %s16
    %p29 = scmp.ge.s32.totalorder %s28, 3
    %s30 = scalar_select %p29, 0, %s28
    %s31 = sadd.s32 1, %s15
    %s32 = scalar_select %p29, %s31, %s15
    %p33 = scmp.ge.s32.totalorder %s32, 1
    %s34 = scalar_select %p33, 0, %s32
    %s35 = ssub.s32 %s15, %s34
    %s36 = ssub.s32 %s17, %s26
    %s37 = sor.u32 %s35, %s36
    %p38 = scmp.eq.s32.totalorder %s37, 0
    %s40 = sadd.s32 %s39, 1
    %s41 = scalar_select %p38, %s39, %s40
    %p44 = pneg %p38
    %p45 = scmp.eq.s32.totalorder %s8, 2
    %p46 = por %p44, %p45
    %p47 = scmp.ne.s32.totalorder %s39, %s42
    %p48 = scmp.eq.s32.totalorder %s8, 0
    %p49 = por %p47, %p48
    %p50 = scmp.ne.s32.totalorder %s39, %s42
    %p51 = scmp.eq.s32.totalorder %s13, 2
    %p52 = por %p50, %p51
    %p53 = scmp.ne.s32.totalorder %s42, %s43
    %p54 = scmp.eq.s32.totalorder %s13, 0
    %p55 = por %p53, %p54
    %p56 = scmp.ne.s32.totalorder %s42, %s43
    %p57 = scmp.eq.s32.totalorder %s14, 2
    %p58 = por %p56, %p57
    %p60 = scmp.ne.s32.totalorder %s43, %s59
    %p61 = scmp.eq.s32.totalorder %s14, 0
    %p62 = por %p60, %p61
    %s63 = ssub.s32 %s16, %s30
    %s64 = ssub.s32 %s17, %s26
    %s65 = sor.u32 %s63, %s64
    %p66 = scmp.eq.s32.totalorder %s65, 0
    %s68 = sadd.s32 %s67, 1
    %s69 = scalar_select %p66, %s67, %s68
    %p72 = pneg %p66
    %p73 = scmp.eq.s32.totalorder %s8, 2
    %p74 = por %p72, %p73
    %p75 = scmp.ne.s32.totalorder %s67, %s70
    %p76 = scmp.eq.s32.totalorder %s8, 0
    %p77 = por %p75, %p76
    %p78 = scmp.ne.s32.totalorder %s67, %s70
    %p79 = scmp.eq.s32.totalorder %s13, 2
    %p80 = por %p78, %p79
    %p81 = scmp.ne.s32.totalorder %s70, %s71
    %p82 = scmp.eq.s32.totalorder %s13, 0
    %p83 = por %p81, %p82
    %p84 = scmp.ne.s32.totalorder %s70, %s71
    %p85 = scmp.eq.s32.totalorder %s14, 2
    %p86 = por %p84, %p85
    %p88 = scmp.ne.s32.totalorder %s71, %s87
    %p89 = scmp.eq.s32.totalorder %s14, 0
    %p90 = por %p88, %p89
    %s91 = ssub.s32 %s16, %s30
    %s92 = ssub.s32 %s15, %s34
    %s93 = sor.u32 %s91, %s92
    %p94 = scmp.eq.s32.totalorder %s93, 0
    %s96 = sadd.s32 %s95, 1
    %s97 = scalar_select %p94, %s95, %s96
    %p100 = pneg %p94
    %p101 = scmp.eq.s32.totalorder %s8, 2
    %p102 = por %p100, %p101
    %p103 = scmp.ne.s32.totalorder %s95, %s98
    %p104 = scmp.eq.s32.totalorder %s8, 0
    %p105 = por %p103, %p104
    %p106 = scmp.ne.s32.totalorder %s95, %s98
    %p107 = scmp.eq.s32.totalorder %s13, 2
    %p108 = por %p106, %p107
    %p109 = scmp.ne.s32.totalorder %s98, %s99
    %p110 = scmp.eq.s32.totalorder %s13, 0
    %p111 = por %p109, %p110
    %p112 = scmp.ne.s32.totalorder %s98, %s99
    %p113 = scmp.eq.s32.totalorder %s14, 2
    %p114 = por %p112, %p113
    %p116 = scmp.ne.s32.totalorder %s99, %s115
    %p117 = scmp.eq.s32.totalorder %s14, 0
    %p118 = por %p116, %p117
    %p119 = scmp.le.s32.totalorder 1, %s8
    %p120 = scmp.lt.s32.totalorder %s8, 4
    %p121 = pnand %p119, %p120
    %p122 = pneg %p121
    // Predicated region
    $region9: #{_forward_padded.4} parent=5 // pred_check
      _
    $region10: #{_forward_padded.4} parent=5 // pred_check_branch
      %124 = sbr.rel (%p121) target = $region12
    $region11: #{_forward_padded.4} parent=5 // pred_region
      %s125 = ssub.s32 %s8, 1
      // Predicated region
      $region13: #{_forward_padded.4} parent=11 // pred_check
        %p126 = pneg %p55
      $region14: #{_forward_padded.4} parent=11 // pred_check_branch
        %128 = sbr.rel (%p126) target = $region16
      $region15: #{_forward_padded.4} parent=11 // pred_region
        %s129 = smul.u32 16, %s18
        %p130 = scmp.lt.s32.totalorder %s129, 15
        %s131 = scalar_select %p130, %s129, 15
        %p132 = scmp.lt.s32.totalorder %s20, 0
        %s133 = scalar_select %p132, %s20, 0
        %s134 = sadd.s32 %s133, %s131
        %s135 = smul.addr %s134, 4
        %s136 = scalar_lea.vmem %s0, %s135
        %s137 = smul.u32 16, %s18
      $region16: #{_forward_padded.4} parent=11 // pred_fallthru
        _
    $region12: #{_forward_padded.4} parent=5 // pred_fallthru
      _
    %p138 = scmp.lt.s32.totalorder %s8, 3
    // Predicated region
    $region17: #{_forward_padded.4} parent=5 // pred_check
      %p139 = pneg %p138
    $region18: #{_forward_padded.4} parent=5 // pred_check_branch
      %141 = sbr.rel (%p139) target = $region20
    $region19: #{_forward_padded.4} parent=5 // pred_region
      // Predicated region
      $region21: #{_forward_padded.4} parent=19 // pred_check
        %p142 = pneg %p77
      $region22: #{_forward_padded.4} parent=19 // pred_check_branch
        %144 = sbr.rel (%p142) target = $region24
      $region23: #{_forward_padded.4} parent=19 // pred_region
        %s145 = smul.u32 16, %s17
        %p146 = scmp.lt.s32.totalorder %s16, 2
        %s147 = scalar_select %p146, %s16, 2
        %p148 = scmp.lt.s32.totalorder %s145, 15
        %s149 = scalar_select %p148, %s145, 15
        %s150 = smul.addr %s147, 16
        %s151 = sadd.s32 %s149, %s150
        %s152 = smul.addr %s151, 4
        %s153 = scalar_lea.vmem %s1, %s152
        %s154 = smul.u32 16, %s17
      $region24: #{_forward_padded.4} parent=19 // pred_fallthru
        _
    $region20: #{_forward_padded.4} parent=5 // pred_fallthru
      _
    %p155 = scmp.le.s32.totalorder 1, %s8
    %p156 = scmp.lt.s32.totalorder %s8, 4
    %p157 = pnand %p155, %p156
    %p158 = pneg %p157
    // Predicated region
    $region25: #{_forward_padded.4} parent=5 // pred_check
      _
    $region26: #{_forward_padded.4} parent=5 // pred_check_branch
      %160 = sbr.rel (%p157) target = $region28
    $region27: #{_forward_padded.4} parent=5 // pred_region
      %s161 = ssub.s32 %s8, 1
      %s162 = smul.u32 16, %s18
      %p163 = scmp.lt.s32.totalorder %s162, 15
      %s164 = scalar_select %p163, %s162, 15
      %p165 = scmp.lt.s32.totalorder %s20, 0
      %s166 = scalar_select %p165, %s20, 0
      %s167 = sadd.s32 %s166, %s164
      %s168 = smul.addr %s167, 4
      %s169 = scalar_lea.vmem %s0, %s168
      %p170 = pneg %p55
      %p171 = pneg %p52
      %s172 = smul.u32 16, %s20
      %p173 = scmp.lt.s32.totalorder %s19, 2
      %s174 = scalar_select %p173, %s19, 2
      %p175 = scmp.lt.s32.totalorder %s172, 15
      %s176 = scalar_select %p175, %s172, 15
      %s177 = smul.addr %s174, 16
      %s178 = sadd.s32 %s176, %s177
      %s179 = smul.addr %s178, 4
      %s180 = scalar_lea.vmem %s1, %s179
      %p181 = pneg %p83
      %p182 = pneg %p80
      %p183 = pneg %p111
      %p184 = pneg %p108
      %s185 = smul.u32 16, %s18
      %p186 = scmp.lt.s32.totalorder %s19, 2
      %s187 = scalar_select %p186, %s19, 2
      %p188 = scmp.lt.s32.totalorder %s185, 15
      %s189 = scalar_select %p188, %s185, 15
      %s190 = smul.addr %s187, 16
      %s191 = sadd.s32 %s189, %s190
      %s192 = smul.addr %s191, 4
      %s193 = scalar_lea.vmem %s2, %s192
      %s194 = smul.u32 16, %s18
      %p195 = scmp.lt.s32.totalorder %s194, 15
      %s196 = scalar_select %p195, %s194, 15
      %p197 = scmp.lt.s32.totalorder %s20, 0
      %s198 = scalar_select %p197, %s20, 0
      %s199 = sadd.s32 %s198, %s196
      %s200 = smul.addr %s199, 4
      %s201 = scalar_lea.vmem %s0, %s200
      %s202 = smul.u32 16, %s18
      %s203 = smul.u32 16, %s20
      %p204 = scmp.lt.s32.totalorder %s19, 2
      %s205 = scalar_select %p204, %s19, 2
      %p206 = scmp.lt.s32.totalorder %s203, 15
      %s207 = scalar_select %p206, %s203, 15
      %s208 = smul.addr %s205, 16
      %s209 = sadd.s32 %s207, %s208
      %s210 = smul.addr %s209, 4
      %s211 = scalar_lea.vmem %s1, %s210
      %s212 = smul.u32 16, %s20
      %s213 = smul.u32 16, %s18
      %p214 = scmp.lt.s32.totalorder %s19, 2
      %s215 = scalar_select %p214, %s19, 2
      %p216 = scmp.lt.s32.totalorder %s213, 15
      %s217 = scalar_select %p216, %s213, 15
      %s218 = smul.addr %s215, 16
      %s219 = sadd.s32 %s217, %s218
      %s220 = smul.addr %s219, 4
      %s221 = scalar_lea.vmem %s2, %s220
      %s222 = smul.u32 16, %s18
      %p224 = scmp.eq.s32.totalorder %s20, 0
      // Predicated region
      $region29: #{_forward_padded.4} parent=27 // pred_check
        %p225 = pneg %p224
      $region30: #{_forward_padded.4} parent=27 // pred_check_branch
        %227 = sbr.rel (%p225) target = $region32
      $region31: #{_forward_padded.4} parent=27 // pred_region
        %228 = vst [vmem:[#allocation2] sm:$0xff] 0.0
        %229 = vst [vmem:[#allocation2 + $0x8] sm:$0xff] 0.0
        %230 = vst [vmem:[#allocation2 + $0x10] sm:$0xff] 0.0
        %231 = vst [vmem:[#allocation2 + $0x18] sm:$0xff] 0.0
        %232 = vst [vmem:[#allocation2 + $0x20] sm:$0xff] 0.0
        %233 = vst [vmem:[#allocation2 + $0x28] sm:$0xff] 0.0
        %234 = vst [vmem:[#allocation2 + $0x30] sm:$0xff] 0.0
        %235 = vst [vmem:[#allocation2 + $0x38] sm:$0xff] 0.0
        %236 = vst [vmem:[#allocation2 + $0x40] sm:$0xff] 0.0
        %237 = vst [vmem:[#allocation2 + $0x48] sm:$0xff] 0.0
        %238 = vst [vmem:[#allocation2 + $0x50] sm:$0xff] 0.0
        %239 = vst [vmem:[#allocation2 + $0x58] sm:$0xff] 0.0
        %240 = vst [vmem:[#allocation2 + $0x60] sm:$0xff] 0.0
        %241 = vst [vmem:[#allocation2 + $0x68] sm:$0xff] 0.0
        %242 = vst [vmem:[#allocation2 + $0x70] sm:$0xff] 0.0
        %243 = vst [vmem:[#allocation2 + $0x78] sm:$0xff] 0.0
      $region32: #{_forward_padded.4} parent=27 // pred_fallthru
        _
      %v244 = vld [vmem:[#allocation2] sm:$0xff]
      %v245 = vld [vmem:[#allocation2 + $0x8] sm:$0xff]
      %v246 = vld [vmem:[#allocation2 + $0x10] sm:$0xff]
      %v247 = vld [vmem:[#allocation2 + $0x18] sm:$0xff]
      %v248 = vld [vmem:[#allocation2 + $0x20] sm:$0xff]
      %v249 = vld [vmem:[#allocation2 + $0x28] sm:$0xff]
      %v250 = vld [vmem:[#allocation2 + $0x30] sm:$0xff]
      %v251 = vld [vmem:[#allocation2 + $0x38] sm:$0xff]
      %v252 = vld [vmem:[#allocation2 + $0x40] sm:$0xff]
      %v253 = vld [vmem:[#allocation2 + $0x48] sm:$0xff]
      %v254 = vld [vmem:[#allocation2 + $0x50] sm:$0xff]
      %v255 = vld [vmem:[#allocation2 + $0x58] sm:$0xff]
      %v256 = vld [vmem:[#allocation2 + $0x60] sm:$0xff]
      %v257 = vld [vmem:[#allocation2 + $0x68] sm:$0xff]
      %v258 = vld [vmem:[#allocation2 + $0x70] sm:$0xff]
      %v259 = vld [vmem:[#allocation2 + $0x78] sm:$0xff]
      %v260 = vld [vmem:[%s201] sm:$0xf]
      %v261 = vld [vmem:[%s201 + $0x4] sm:$0xf]
      %v262 = vld [vmem:[%s201 + $0x8] sm:$0xf]
      %v263 = vld [vmem:[%s201 + $0xc] sm:$0xf]
      %v264 = vld [vmem:[%s201 + $0x10] sm:$0xf]
      %v265 = vld [vmem:[%s201 + $0x14] sm:$0xf]
      %v266 = vld [vmem:[%s201 + $0x18] sm:$0xf]
      %v267 = vld [vmem:[%s201 + $0x1c] sm:$0xf]
      %v268 = vld [vmem:[%s201 + $0x20] sm:$0xf]
      %v269 = vld [vmem:[%s201 + $0x24] sm:$0xf]
      %v270 = vld [vmem:[%s201 + $0x28] sm:$0xf]
      %v271 = vld [vmem:[%s201 + $0x2c] sm:$0xf]
      %v272 = vld [vmem:[%s201 + $0x30] sm:$0xf]
      %v273 = vld [vmem:[%s201 + $0x34] sm:$0xf]
      %v274 = vld [vmem:[%s201 + $0x38] sm:$0xf]
      %v275 = vld [vmem:[%s201 + $0x3c] sm:$0xf]
      %v276 = vld [vmem:[%s211] sm:$0xf]
      %v277 = vld [vmem:[%s211 + $0x4] sm:$0xf]
      %v278 = vld [vmem:[%s211 + $0x8] sm:$0xf]
      %v279 = vld [vmem:[%s211 + $0xc] sm:$0xf]
      %v280 = vld [vmem:[%s211 + $0x10] sm:$0xf]
      %v281 = vld [vmem:[%s211 + $0x14] sm:$0xf]
      %v282 = vld [vmem:[%s211 + $0x18] sm:$0xf]
      %v283 = vld [vmem:[%s211 + $0x1c] sm:$0xf]
      %v284 = vld [vmem:[%s211 + $0x20] sm:$0xf]
      %v285 = vld [vmem:[%s211 + $0x24] sm:$0xf]
      %v286 = vld [vmem:[%s211 + $0x28] sm:$0xf]
      %v287 = vld [vmem:[%s211 + $0x2c] sm:$0xf]
      %v288 = vld [vmem:[%s211 + $0x30] sm:$0xf]
      %v289 = vld [vmem:[%s211 + $0x34] sm:$0xf]
      %v290 = vld [vmem:[%s211 + $0x38] sm:$0xf]
      %v291 = vld [vmem:[%s211 + $0x3c] sm:$0xf]
      %v308 = vunpack.c.l.b16 %v260
      %v309 = vunpack.c.l.b16 %v261
      %v310 = vunpack.c.l.b16 %v262
      %v311 = vunpack.c.l.b16 %v263
      %v312 = vunpack.c.l.b16 %v264
      %v313 = vunpack.c.l.b16 %v265
      %v314 = vunpack.c.l.b16 %v266
      %v315 = vunpack.c.l.b16 %v267
      %v316 = vunpack.c.l.b16 %v268
      %v317 = vunpack.c.l.b16 %v269
      %v318 = vunpack.c.l.b16 %v270
      %v319 = vunpack.c.l.b16 %v271
      %v320 = vunpack.c.l.b16 %v272
      %v321 = vunpack.c.l.b16 %v273
      %v322 = vunpack.c.l.b16 %v274
      %v323 = vunpack.c.l.b16 %v275
      %v324 = vpack.c.b16 %v309, %v308
      %v325 = vpack.c.b16 %v311, %v310
      %v326 = vpack.c.b16 %v313, %v312
      %v327 = vpack.c.b16 %v315, %v314
      %v328 = vpack.c.b16 %v317, %v316
      %v329 = vpack.c.b16 %v319, %v318
      %v330 = vpack.c.b16 %v321, %v320
      %v331 = vpack.c.b16 %v323, %v322
      %v356 = vunpack.c.l.b16 %v276
      %v357 = vunpack.c.l.b16 %v277
      %v358 = vunpack.c.l.b16 %v278
      %v359 = vunpack.c.l.b16 %v279
      %v360 = vunpack.c.l.b16 %v280
      %v361 = vunpack.c.l.b16 %v281
      %v362 = vunpack.c.l.b16 %v282
      %v363 = vunpack.c.l.b16 %v283
      %v364 = vunpack.c.l.b16 %v284
      %v365 = vunpack.c.l.b16 %v285
      %v366 = vunpack.c.l.b16 %v286
      %v367 = vunpack.c.l.b16 %v287
      %v368 = vunpack.c.l.b16 %v288
      %v369 = vunpack.c.l.b16 %v289
      %v370 = vunpack.c.l.b16 %v290
      %v371 = vunpack.c.l.b16 %v291
      %v372 = vpack.c.b16 %v357, %v356
      %v373 = vpack.c.b16 %v359, %v358
      %v374 = vpack.c.b16 %v361, %v360
      %v375 = vpack.c.b16 %v363, %v362
      %v376 = vpack.c.b16 %v365, %v364
      %v377 = vpack.c.b16 %v367, %v366
      %v378 = vpack.c.b16 %v369, %v368
      %v379 = vpack.c.b16 %v371, %v370
      %388 = vmatprep.subr.bf16.mxu0 0
      %389 = vmatpush1.bf16.msra.mxu0 %v372
      %390 = vmatprep.subr.bf16.mxu0 0
      %391 = vmatpush1.bf16.msra.mxu0 %v373
      %392 = vmatprep.subr.bf16.mxu0 0
      %393 = vmatpush1.bf16.msra.mxu0 %v374
      %394 = vmatprep.subr.bf16.mxu0 0
      %395 = vmatpush1.bf16.msra.mxu0 %v375
      %396 = vmatprep.subr.bf16.mxu0 0
      %397 = vmatpush1.bf16.msra.mxu0 %v376
      %398 = vmatprep.subr.bf16.mxu0 0
      %399 = vmatpush1.bf16.msra.mxu0 %v377
      %400 = vmatprep.subr.bf16.mxu0 0
      %401 = vmatpush1.bf16.msra.mxu0 %v378
      %402 = vmatprep.subr.bf16.mxu0 0
      %403 = vmatpush1.bf16.msra.mxu0 %v379
      %404 = vmatprep.subr.bf16.mxu0 0
      %405 = vmatpush1.bf16.msra.mxu0 0
      %406 = vmatprep.subr.bf16.mxu0 0
      %407 = vmatpush1.bf16.msra.mxu0 0
      %408 = vmatprep.subr.bf16.mxu0 0
      %409 = vmatpush1.bf16.msra.mxu0 0
      %410 = vmatprep.subr.bf16.mxu0 0
      %411 = vmatpush1.bf16.msra.mxu0 0
      %412 = vmatprep.subr.bf16.mxu0 0
      %413 = vmatpush1.bf16.msra.mxu0 0
      %414 = vmatprep.subr.bf16.mxu0 0
      %415 = vmatpush1.bf16.msra.mxu0 0
      %416 = vmatprep.subr.bf16.mxu0 0
      %417 = vmatpush1.bf16.msra.mxu0 0
      %418 = vmatprep.subr.bf16.mxu0 0
      %419 = vmatpush1.bf16.msra.mxu0 0
      %420 = vmatprep.mubr.bf16.mxu0 0
      %421 = vmatmul.mubr.bf16.gmra.mrb[0].mxu0 %v324
      %v422 = vpop.f32.mrb[0].mxu0
      %v423 = vadd.f32 0.0, %v422
      %v424 = vpop.f32.mrb[0].mxu0
      %v425 = vpop.f32.mrb[0].mxu0
      %v426 = vadd.f32 0.0, %v425
      %v427 = vpop.f32.mrb[0].mxu0
      %428 = vmatprep.mubr.bf16.mxu0 0
      %429 = vmatmul.mubr.bf16.gmra.mrb[0].mxu0 %v325
      %v430 = vpop.f32.mrb[0].mxu0
      %v431 = vadd.f32 0.0, %v430
      %v432 = vpop.f32.mrb[0].mxu0
      %v433 = vpop.f32.mrb[0].mxu0
      %v434 = vadd.f32 0.0, %v433
      %v435 = vpop.f32.mrb[0].mxu0
      %436 = vmatprep.mubr.bf16.mxu0 0
      %437 = vmatmul.mubr.bf16.gmra.mrb[0].mxu0 %v326
      %v438 = vpop.f32.mrb[0].mxu0
      %v439 = vadd.f32 0.0, %v438
      %v440 = vpop.f32.mrb[0].mxu0
      %v441 = vpop.f32.mrb[0].mxu0
      %v442 = vadd.f32 0.0, %v441
      %v443 = vpop.f32.mrb[0].mxu0
      %444 = vmatprep.mubr.bf16.mxu0 0
      %445 = vmatmul.mubr.bf16.gmra.mrb[0].mxu0 %v327
      %v446 = vpop.f32.mrb[0].mxu0
      %v447 = vadd.f32 0.0, %v446
      %v448 = vpop.f32.mrb[0].mxu0
      %v449 = vpop.f32.mrb[0].mxu0
      %v450 = vadd.f32 0.0, %v449
      %v451 = vpop.f32.mrb[0].mxu0
      %452 = vmatprep.mubr.bf16.mxu0 0
      %453 = vmatmul.mubr.bf16.gmra.mrb[0].mxu0 %v328
      %v454 = vpop.f32.mrb[0].mxu0
      %v455 = vadd.f32 0.0, %v454
      %v456 = vpop.f32.mrb[0].mxu0
      %v457 = vpop.f32.mrb[0].mxu0
      %v458 = vadd.f32 0.0, %v457
      %v459 = vpop.f32.mrb[0].mxu0
      %460 = vmatprep.mubr.bf16.mxu0 0
      %461 = vmatmul.mubr.bf16.gmra.mrb[0].mxu0 %v329
      %v462 = vpop.f32.mrb[0].mxu0
      %v463 = vadd.f32 0.0, %v462
      %v464 = vpop.f32.mrb[0].mxu0
      %v465 = vpop.f32.mrb[0].mxu0
      %v466 = vadd.f32 0.0, %v465
      %v467 = vpop.f32.mrb[0].mxu0
      %468 = vmatprep.mubr.bf16.mxu0 0
      %469 = vmatmul.mubr.bf16.gmra.mrb[0].mxu0 %v330
      %v470 = vpop.f32.mrb[0].mxu0
      %v471 = vadd.f32 0.0, %v470
      %v472 = vpop.f32.mrb[0].mxu0
      %v473 = vpop.f32.mrb[0].mxu0
      %v474 = vadd.f32 0.0, %v473
      %v475 = vpop.f32.mrb[0].mxu0
      %476 = vmatprep.mubr.bf16.mxu0 0
      %477 = vmatmul.mubr.bf16.gmra.mrb[0].mxu0 %v331
      %v478 = vpop.f32.mrb[0].mxu0
      %v479 = vadd.f32 0.0, %v478
      %v480 = vpop.f32.mrb[0].mxu0
      %v481 = vpop.f32.mrb[0].mxu0
      %v482 = vadd.f32 0.0, %v481
      %v483 = vpop.f32.mrb[0].mxu0
      %484 = vdwg.mxu0
      %v485 = vadd.f32 %v244, %v423
      %v486 = vadd.f32 %v245, %v426
      %v487 = vadd.f32 %v246, %v431
      %v488 = vadd.f32 %v247, %v434
      %v489 = vadd.f32 %v248, %v439
      %v490 = vadd.f32 %v249, %v442
      %v491 = vadd.f32 %v250, %v447
      %v492 = vadd.f32 %v251, %v450
      %v493 = vadd.f32 %v252, %v455
      %v494 = vadd.f32 %v253, %v458
      %v495 = vadd.f32 %v254, %v463
      %v496 = vadd.f32 %v255, %v466
      %v497 = vadd.f32 %v256, %v471
      %v498 = vadd.f32 %v257, %v474
      %v499 = vadd.f32 %v258, %v479
      %v500 = vadd.f32 %v259, %v482
      %501 = vst [vmem:[#allocation2] sm:$0xff] %v485
      %502 = vst [vmem:[#allocation2 + $0x8] sm:$0xff] %v486
      %503 = vst [vmem:[#allocation2 + $0x10] sm:$0xff] %v487
      %504 = vst [vmem:[#allocation2 + $0x18] sm:$0xff] %v488
      %505 = vst [vmem:[#allocation2 + $0x20] sm:$0xff] %v489
      %506 = vst [vmem:[#allocation2 + $0x28] sm:$0xff] %v490
      %507 = vst [vmem:[#allocation2 + $0x30] sm:$0xff] %v491
      %508 = vst [vmem:[#allocation2 + $0x38] sm:$0xff] %v492
      %509 = vst [vmem:[#allocation2 + $0x40] sm:$0xff] %v493
      %510 = vst [vmem:[#allocation2 + $0x48] sm:$0xff] %v494
      %511 = vst [vmem:[#allocation2 + $0x50] sm:$0xff] %v495
      %512 = vst [vmem:[#allocation2 + $0x58] sm:$0xff] %v496
      %513 = vst [vmem:[#allocation2 + $0x60] sm:$0xff] %v497
      %514 = vst [vmem:[#allocation2 + $0x68] sm:$0xff] %v498
      %515 = vst [vmem:[#allocation2 + $0x70] sm:$0xff] %v499
      %516 = vst [vmem:[#allocation2 + $0x78] sm:$0xff] %v500
      // Predicated region
      $region33: #{_forward_padded.4} parent=27 // pred_check
        %p517 = pneg %p224
      $region34: #{_forward_padded.4} parent=27 // pred_check_branch
        %519 = sbr.rel (%p517) target = $region36
      $region35: #{_forward_padded.4} parent=27 // pred_region
        %v520 = vld [vmem:[#allocation2] sm:$0xff]
        %v521 = vld [vmem:[#allocation2 + $0x8] sm:$0xff]
        %v522 = vld [vmem:[#allocation2 + $0x10] sm:$0xff]
        %v523 = vld [vmem:[#allocation2 + $0x18] sm:$0xff]
        %v524 = vld [vmem:[#allocation2 + $0x20] sm:$0xff]
        %v525 = vld [vmem:[#allocation2 + $0x28] sm:$0xff]
        %v526 = vld [vmem:[#allocation2 + $0x30] sm:$0xff]
        %v527 = vld [vmem:[#allocation2 + $0x38] sm:$0xff]
        %v528 = vld [vmem:[#allocation2 + $0x40] sm:$0xff]
        %v529 = vld [vmem:[#allocation2 + $0x48] sm:$0xff]
        %v530 = vld [vmem:[#allocation2 + $0x50] sm:$0xff]
        %v531 = vld [vmem:[#allocation2 + $0x58] sm:$0xff]
        %v532 = vld [vmem:[#allocation2 + $0x60] sm:$0xff]
        %v533 = vld [vmem:[#allocation2 + $0x68] sm:$0xff]
        %v534 = vld [vmem:[#allocation2 + $0x70] sm:$0xff]
        %v535 = vld [vmem:[#allocation2 + $0x78] sm:$0xff]
        %v536 = vpack.c.bf16 %v521, %v520
        %v537 = vpack.c.bf16 %v523, %v522
        %v538 = vpack.c.bf16 %v525, %v524
        %v539 = vpack.c.bf16 %v527, %v526
        %v540 = vpack.c.bf16 %v529, %v528
        %v541 = vpack.c.bf16 %v531, %v530
        %v542 = vpack.c.bf16 %v533, %v532
        %v543 = vpack.c.bf16 %v535, %v534
        %v552 = vunpack.c.l.b16 %v536
        %v553 = vunpack.c.h.b16 %v536
        %v554 = vunpack.c.l.b16 %v537
        %v555 = vunpack.c.h.b16 %v537
        %v556 = vunpack.c.l.b16 %v538
        %v557 = vunpack.c.h.b16 %v538
        %v558 = vunpack.c.l.b16 %v539
        %v559 = vunpack.c.h.b16 %v539
        %v560 = vunpack.c.l.b16 %v540
        %v561 = vunpack.c.h.b16 %v540
        %v562 = vunpack.c.l.b16 %v541
        %v563 = vunpack.c.h.b16 %v541
        %v564 = vunpack.c.l.b16 %v542
        %v565 = vunpack.c.h.b16 %v542
        %v566 = vunpack.c.l.b16 %v543
        %v567 = vunpack.c.h.b16 %v543
        %v568 = vpack.c.b16 %v552, %v552
        %v569 = vpack.c.b16 %v553, %v553
        %v570 = vpack.c.b16 %v554, %v554
        %v571 = vpack.c.b16 %v555, %v555
        %v572 = vpack.c.b16 %v556, %v556
        %v573 = vpack.c.b16 %v557, %v557
        %v574 = vpack.c.b16 %v558, %v558
        %v575 = vpack.c.b16 %v559, %v559
        %v576 = vpack.c.b16 %v560, %v560
        %v577 = vpack.c.b16 %v561, %v561
        %v578 = vpack.c.b16 %v562, %v562
        %v579 = vpack.c.b16 %v563, %v563
        %v580 = vpack.c.b16 %v564, %v564
        %v581 = vpack.c.b16 %v565, %v565
        %v582 = vpack.c.b16 %v566, %v566
        %v583 = vpack.c.b16 %v567, %v567
        %600 = vst [vmem:[%s221] sm:$0xf] %v568
        %601 = vst [vmem:[%s221 + $0x4] sm:$0xf] %v569
        %602 = vst [vmem:[%s221 + $0x8] sm:$0xf] %v570
        %603 = vst [vmem:[%s221 + $0xc] sm:$0xf] %v571
        %604 = vst [vmem:[%s221 + $0x10] sm:$0xf] %v572
        %605 = vst [vmem:[%s221 + $0x14] sm:$0xf] %v573
        %606 = vst [vmem:[%s221 + $0x18] sm:$0xf] %v574
        %607 = vst [vmem:[%s221 + $0x1c] sm:$0xf] %v575
        %608 = vst [vmem:[%s221 + $0x20] sm:$0xf] %v576
        %609 = vst [vmem:[%s221 + $0x24] sm:$0xf] %v577
        %610 = vst [vmem:[%s221 + $0x28] sm:$0xf] %v578
        %611 = vst [vmem:[%s221 + $0x2c] sm:$0xf] %v579
        %612 = vst [vmem:[%s221 + $0x30] sm:$0xf] %v580
        %613 = vst [vmem:[%s221 + $0x34] sm:$0xf] %v581
        %614 = vst [vmem:[%s221 + $0x38] sm:$0xf] %v582
        %615 = vst [vmem:[%s221 + $0x3c] sm:$0xf] %v583
      $region36: #{_forward_padded.4} parent=27 // pred_fallthru
        _
      %s616 = smul.u32 16, %s18
      %p617 = scmp.lt.s32.totalorder %s19, 2
      %s618 = scalar_select %p617, %s19, 2
      %p619 = scmp.lt.s32.totalorder %s616, 15
      %s620 = scalar_select %p619, %s616, 15
      %s621 = smul.addr %s618, 16
      %s622 = sadd.s32 %s620, %s621
      %s623 = smul.addr %s622, 4
      %s624 = scalar_lea.vmem %s2, %s623
      // Predicated region
      $region37: #{_forward_padded.4} parent=27 // pred_check
        %p625 = pneg %p108
      $region38: #{_forward_padded.4} parent=27 // pred_check_branch
        %627 = sbr.rel (%p625) target = $region40
      $region39: #{_forward_padded.4} parent=27 // pred_region
        %s628 = smul.u32 16, %s18
      $region40: #{_forward_padded.4} parent=27 // pred_fallthru
        _
    $region28: #{_forward_padded.4} parent=5 // pred_fallthru
      _
    %p629 = scmp.le.s32.totalorder 2, %s8
    // Predicated region
    $region41: #{_forward_padded.4} parent=5 // pred_check
      %p630 = pneg %p629
    $region42: #{_forward_padded.4} parent=5 // pred_check_branch
      %632 = sbr.rel (%p630) target = $region44
    $region43: #{_forward_padded.4} parent=5 // pred_region
      %s633 = ssub.s32 %s8, 2
      // Predicated region
      $region45: #{_forward_padded.4} parent=43 // pred_check
        %p634 = pneg %p114
      $region46: #{_forward_padded.4} parent=43 // pred_check_branch
        %636 = sbr.rel (%p634) target = $region48
      $region47: #{_forward_padded.4} parent=43 // pred_region
        %s637 = smul.u32 16, %s21
        %p638 = scmp.lt.s32.totalorder %s22, 2
        %s639 = scalar_select %p638, %s22, 2
        %p640 = scmp.lt.s32.totalorder %s637, 15
        %s641 = scalar_select %p640, %s637, 15
        %s642 = smul.addr %s639, 16
        %s643 = sadd.s32 %s641, %s642
        %s644 = smul.addr %s643, 4
        %s645 = scalar_lea.vmem %s2, %s644
      $region48: #{_forward_padded.4} parent=43 // pred_fallthru
        _
    $region44: #{_forward_padded.4} parent=5 // pred_fallthru
      _
  $region6: #{_forward_padded.4} parent=0 // loop_footer
    %s12 = sadd.s32 1, %s8
  $region7: #{_forward_padded.4} parent=0 // loop_footer_branch
    %7 = sbr.rel target = $region3
  $region8: #{_forward_padded.4} parent=0 // loop_exit
    _

</llo_original>
